<compile_context>
chip_gen: v7x
topology: tpu7x:2x2x1
jax: 0.10.0
libtpu: 0.0.40
codegen_flags: <defaults>
</compile_context>

<pallas_src>
import math
from functools import partial

import jax
import jax.numpy as jnp
from jax.experimental import pallas as pl
from jax.experimental.pallas import tpu as pltpu

# ---------------- synthetic "BiomedCLIP text tower" config (small shapes) ----------------
VOCAB = 128          # stand-in vocab
HIDDEN = 32          # hidden size (real model: 768)
N_HEADS = 4          # attention heads (real model: 12)
HEAD_DIM = HIDDEN // N_HEADS
FFN = 4 * HIDDEN     # intermediate size
N_LAYERS = 2         # transformer layers (real model: 12)
MAX_LEN = 8          # stand-in for max_length=77
LN_EPS = 1e-12       # BERT LayerNorm eps
PAD_ID = 0           # [PAD] token id

# rows of the per-layer (6, H) bias/LN slab
_BO, _B2, _LN1G, _LN1B, _LN2G, _LN2B = range(6)


# ---------------------------------- fused tower kernel ----------------------------------
def _tower_kernel(x_emb_ref, valid_ref, emb_ln_ref,
                  wqkv_ref, bqkv_ref, wo_ref,
                  w1_ref, b1_ref, w2_ref, bias_h_ref,
                  o_ref, x_sc,
                  *, batch, seq, hidden, n_heads, head_dim, scale):
    """One grid step == one post-LN BERT encoder layer over ALL B*L rows.

    Activations persist in x_sc (VMEM) across layer steps; per-layer weights are streamed
    per step via the stacked (N_LAYERS, ...) inputs.
    """
    layer = pl.program_id(0)

    def ln(h, gamma, beta):                      # f32 LayerNorm over the last dim
        mu = jnp.mean(h, axis=-1, keepdims=True)
        var = jnp.mean(jnp.square(h - mu), axis=-1, keepdims=True)
        return (h - mu) * jax.lax.rsqrt(var + LN_EPS) * gamma + beta

    # ---- first step: embedding LayerNorm (embedding gathers done in JAX glue) ----
    @pl.when(layer == 0)
    def _():
        x_sc[...] = ln(x_emb_ref[...], emb_ln_ref[0:1, :], emb_ln_ref[1:2, :])

    x = x_sc[...]                                              # (M, H) f32, VMEM-resident

    # key-padding additive bias built in-kernel from the (B, L) validity mask
    key_bias = ((valid_ref[...] - 1.0) * 1e9)[:, None, :]      # (B, 1, L): 0 valid / -1e9 pad

    # ---- fused QKV projection: one bf16 MXU GEMM, f32 accumulation ----
    qkv = jnp.dot(x.astype(jnp.bfloat16), wqkv_ref[...],
                  preferred_element_type=jnp.float32) + bqkv_ref[...]      # (M, 3H) f32

    # ---- multi-head self-attention, batched over the batch dim (no k.T transposes) ----
    # TODO(synk): at real head_dim=64 slice >=2 heads per einsum so slices are 128-lane aligned,
    # and cast q/k/v/p to bf16; kept f32 here (softmax math in f32, toy head_dim=8).
    ctx_heads = []
    for h in range(n_heads):
        lo = h * head_dim
        q = qkv[:, lo:lo + head_dim].reshape(batch, seq, head_dim)
        k = qkv[:, hidden + lo:hidden + lo + head_dim].reshape(batch, seq, head_dim)
        v = qkv[:, 2 * hidden + lo:2 * hidden + lo + head_dim].reshape(batch, seq, head_dim)
        s = jnp.einsum("bqd,bkd->bqk", q, k,
                       preferred_element_type=jnp.float32) * scale + key_bias   # (B, L, L)
        m = jnp.max(s, axis=-1, keepdims=True)
        p = jnp.exp(s - m)
        p = p * pl.reciprocal(jnp.sum(p, axis=-1, keepdims=True), approx=True)
        ctx_heads.append(jnp.einsum("bqk,bkd->bqd", p, v,
                                    preferred_element_type=jnp.float32))        # (B, L, dH)
    ctx = jnp.concatenate(ctx_heads, axis=-1).reshape(batch * seq, hidden)      # (M, H)

    # single output-projection GEMM over the concatenated heads
    attn = jnp.dot(ctx.astype(jnp.bfloat16), wo_ref[...],
                   preferred_element_type=jnp.float32) + bias_h_ref[_BO:_BO + 1, :]

    # ---- residual + LayerNorm 1 ----
    x1 = ln(x + attn, bias_h_ref[_LN1G:_LN1G + 1, :], bias_h_ref[_LN1B:_LN1B + 1, :])

    # ---- feed-forward (W1 + GELU, W2), bf16 GEMMs ----
    hmid = jnp.dot(x1.astype(jnp.bfloat16), w1_ref[...],
                   preferred_element_type=jnp.float32) + b1_ref[...]
    # TODO(synk): HF BERT uses exact erf-GELU; tanh-approx GELU used here for Mosaic-safe lowering.
    hmid = jax.nn.gelu(hmid, approximate=True)
    ffn = jnp.dot(hmid.astype(jnp.bfloat16), w2_ref[...],
                  preferred_element_type=jnp.float32) + bias_h_ref[_B2:_B2 + 1, :]

    # ---- residual + LayerNorm 2 ----
    x_new = ln(x1 + ffn, bias_h_ref[_LN2G:_LN2G + 1, :], bias_h_ref[_LN2B:_LN2B + 1, :])
    x_sc[...] = x_new

    # constant output block index -> HBM writeback happens once, after the last layer
    o_ref[...] = x_new


# ---------------------------------- pallas_call wrapper ----------------------------------
def pallas_text_tower(x_emb, valid, params, *, batch, seq):
    """x_emb: (B*L, H) f32 summed embeddings; valid: (B, L) f32 1/0 key mask."""
    M, H = x_emb.shape
    kernel = partial(_tower_kernel, batch=batch, seq=seq, hidden=HIDDEN,
                     n_heads=N_HEADS, head_dim=HEAD_DIM, scale=1.0 / math.sqrt(HEAD_DIM))
    layer = lambda l: (l, 0, 0)      # per-layer weight streaming
    const2 = lambda l: (0, 0)        # resident across all layer steps

    return pl.pallas_call(
        kernel,
        out_shape=jax.ShapeDtypeStruct((M, H), jnp.float32),
        grid=(N_LAYERS,),
        in_specs=[
            pl.BlockSpec((M, H), const2),                        # summed embeddings
            pl.BlockSpec((batch, seq), const2),                  # key-validity mask
            pl.BlockSpec((2, H), const2),                        # emb LN gamma/beta
            pl.BlockSpec((None, H, 3 * H), layer),               # Wqkv (bf16)
            pl.BlockSpec((None, 1, 3 * H), layer),               # bqkv
            pl.BlockSpec((None, H, H), layer),                   # Wo   (bf16)
            pl.BlockSpec((None, H, FFN), layer),                 # W1   (bf16)
            pl.BlockSpec((None, 1, FFN), layer),                 # b1
            pl.BlockSpec((None, FFN, H), layer),                 # W2   (bf16)
            pl.BlockSpec((None, 6, H), layer),                   # [bo,b2,ln1_g,ln1_b,ln2_g,ln2_b]
        ],
        out_specs=pl.BlockSpec((M, H), const2),
        scratch_shapes=[pltpu.VMEM((M, H), jnp.float32)],        # layer-resident activations
        compiler_params=pltpu.CompilerParams(
            dimension_semantics=("arbitrary",),                  # layers are sequential
            vmem_limit_bytes=32 * 1024 * 1024),
    )(x_emb, valid, params["emb_ln"],
      params["wqkv"], params["bqkv"], params["wo"],
      params["w1"], params["b1"], params["w2"], params["bias_h"])


# ---------------------------------- parameters ----------------------------------
def init_params(key):
    keys = iter(jax.random.split(key, 8))

    def nrm(shape, dtype=jnp.float32):
        return (0.02 * jax.random.normal(next(keys), shape, jnp.float32)).astype(dtype)

    # per-layer H-wide slab rows: [bo, b2, ln1_gamma, ln1_beta, ln2_gamma, ln2_beta]
    one_layer_slab = jnp.stack([
        jnp.zeros((HIDDEN,), jnp.float32),   # bo
        jnp.zeros((HIDDEN,), jnp.float32),   # b2
        jnp.ones((HIDDEN,), jnp.float32),    # ln1 gamma
        jnp.zeros((HIDDEN,), jnp.float32),   # ln1 beta
        jnp.ones((HIDDEN,), jnp.float32),    # ln2 gamma
        jnp.zeros((HIDDEN,), jnp.float32),   # ln2 beta
    ], axis=0)

    return {
        "word_emb": nrm((VOCAB, HIDDEN)),
        "pos_emb": nrm((MAX_LEN, HIDDEN)),
        "type_emb": nrm((2, HIDDEN)),
        "emb_ln": jnp.stack([jnp.ones((HIDDEN,), jnp.float32),
                             jnp.zeros((HIDDEN,), jnp.float32)], axis=0),       # (2, H)
        # stacked per-layer weights; matmul weights in bf16 (MXU bf16 path, halved footprint)
        "wqkv": nrm((N_LAYERS, HIDDEN, 3 * HIDDEN), jnp.bfloat16),
        "bqkv": jnp.zeros((N_LAYERS, 1, 3 * HIDDEN), jnp.float32),
        "wo": nrm((N_LAYERS, HIDDEN, HIDDEN), jnp.bfloat16),
        "w1": nrm((N_LAYERS, HIDDEN, FFN), jnp.bfloat16),
        "b1": jnp.zeros((N_LAYERS, 1, FFN), jnp.float32),
        "w2": nrm((N_LAYERS, FFN, HIDDEN), jnp.bfloat16),
        "bias_h": jnp.tile(one_layer_slab[None], (N_LAYERS, 1, 1)),             # (N_LAYERS, 6, H)
    }


# ---------------------------------- forward (encode) ----------------------------------
def biomedclip_text_encode(params, tokens):
    """tokens: int32 [B, L] (0 == [PAD])  ->  last_hidden_state f32 [B, L, HIDDEN]."""
    B, L = tokens.shape

    # key-padding validity mask (like HF attention_mask); -1e9 bias is built inside the kernel
    valid = (tokens != PAD_ID).astype(jnp.float32)                 # (B, L)

    # Embedding lookups are glue (gather) in plain JAX; everything dense runs in one Pallas call.
    emb = (params["word_emb"][tokens]
           + params["pos_emb"][:L][None, :, :]
           + params["type_emb"][0][None, None, :])
    x = emb.reshape(B * L, HIDDEN).astype(jnp.float32)

    out = pallas_text_tower(x, valid, params, batch=B, seq=L)
    return out.reshape(B, L, HIDDEN)


# ---------------------------------- main ----------------------------------
if __name__ == "__main__":
    root = jax.random.PRNGKey(0)
    kp, kt = jax.random.split(root)

    params = init_params(kp)
    # stand-in for tokenizer output: [batch=2, max_length=8] token ids with [PAD]=0 at the tail
    tokens = jax.random.randint(kt, (2, MAX_LEN), 1, VOCAB, dtype=jnp.int32)
    tokens = tokens.at[1, MAX_LEN - 2:].set(PAD_ID)

    z = biomedclip_text_encode(params, tokens)
    z = jax.block_until_ready(z)

    assert z.shape == (2, MAX_LEN, HIDDEN) and z.dtype == jnp.float32
    assert bool(jnp.all(jnp.isfinite(z)))
    print("KERNEL_OK")
</pallas_src>

<mosaic_0001>
module attributes {stable_mosaic.version = 11 : i64} {
  func.func @_tower_kernel(%arg0: i32, %arg1: memref<16x32xf32, #tpu.memory_space<vmem>>, %arg2: memref<2x8xf32, #tpu.memory_space<vmem>>, %arg3: memref<2x32xf32, #tpu.memory_space<vmem>>, %arg4: memref<1x32x96xbf16, #tpu.memory_space<vmem>>, %arg5: memref<1x1x96xf32, #tpu.memory_space<vmem>>, %arg6: memref<1x32x32xbf16, #tpu.memory_space<vmem>>, %arg7: memref<1x32x128xbf16, #tpu.memory_space<vmem>>, %arg8: memref<1x1x128xf32, #tpu.memory_space<vmem>>, %arg9: memref<1x128x32xbf16, #tpu.memory_space<vmem>>, %arg10: memref<1x6x32xf32, #tpu.memory_space<vmem>>, %arg11: memref<16x32xf32, #tpu.memory_space<vmem>>, %arg12: memref<16x32xf32, #tpu.memory_space<vmem>>) attributes {dimension_semantics = [#tpu.dimension_semantics<arbitrary>], iteration_bounds = array<i64: 2>, scalar_prefetch = 0 : i64, scratch_operands = 1 : i64, tpu.core_type = #tpu.core_type<tc>, window_params = [{pipeline_mode = #tpu.pipeline_mode<synchronous>, transform_indices = @transform_0, window_bounds = array<i64: 16, 32>}, {pipeline_mode = #tpu.pipeline_mode<synchronous>, transform_indices = @transform_1, window_bounds = array<i64: 2, 8>}, {pipeline_mode = #tpu.pipeline_mode<synchronous>, transform_indices = @transform_2, window_bounds = array<i64: 2, 32>}, {transform_indices = @transform_3, window_bounds = array<i64: 1, 32, 96>}, {transform_indices = @transform_4, window_bounds = array<i64: 1, 1, 96>}, {transform_indices = @transform_5, window_bounds = array<i64: 1, 32, 32>}, {transform_indices = @transform_6, window_bounds = array<i64: 1, 32, 128>}, {transform_indices = @transform_7, window_bounds = array<i64: 1, 1, 128>}, {transform_indices = @transform_8, window_bounds = array<i64: 1, 128, 32>}, {transform_indices = @transform_9, window_bounds = array<i64: 1, 6, 32>}, {pipeline_mode = #tpu.pipeline_mode<synchronous>, transform_indices = @transform_10, window_bounds = array<i64: 16, 32>}]} {
    %c0_i32 = arith.constant 0 : i32
    %0 = arith.cmpi eq, %arg0, %c0_i32 : i32
    %1 = arith.extui %0 : i1 to i32
    %c0_i32_0 = arith.constant 0 : i32
    %2 = arith.cmpi ne, %1, %c0_i32_0 : i32
    scf.if %2 {
      %c0_78 = arith.constant 0 : index
      %c0_79 = arith.constant 0 : index
      %201 = vector.load %arg1[%c0_78, %c0_79] : memref<16x32xf32, #tpu.memory_space<vmem>>, vector<16x32xf32>
      %c0_80 = arith.constant 0 : index
      %c0_81 = arith.constant 0 : index
      %202 = vector.load %arg3[%c0_80, %c0_81] : memref<2x32xf32, #tpu.memory_space<vmem>>, vector<1x32xf32>
      %c1_82 = arith.constant 1 : index
      %c0_83 = arith.constant 0 : index
      %203 = vector.load %arg3[%c1_82, %c0_83] : memref<2x32xf32, #tpu.memory_space<vmem>>, vector<1x32xf32>
      %cst_84 = arith.constant dense<0.000000e+00> : vector<16xf32>
      %204 = vector.multi_reduction <add>, %201, %cst_84 [1] : vector<16x32xf32> to vector<16xf32>
      %205 = vector.shape_cast %204 : vector<16xf32> to vector<16x1xf32>
      %cst_85 = arith.constant 3.200000e+01 : f32
      %206 = vector.broadcast %cst_85 : f32 to vector<16x1xf32>
      %207 = arith.divf %205, %206 : vector<16x1xf32>
      %208 = vector.broadcast %207 : vector<16x1xf32> to vector<16x32xf32>
      %209 = arith.subf %201, %208 : vector<16x32xf32>
      %210 = arith.mulf %209, %209 : vector<16x32xf32>
      %cst_86 = arith.constant dense<0.000000e+00> : vector<16xf32>
      %211 = vector.multi_reduction <add>, %210, %cst_86 [1] : vector<16x32xf32> to vector<16xf32>
      %212 = vector.shape_cast %211 : vector<16xf32> to vector<16x1xf32>
      %cst_87 = arith.constant 3.200000e+01 : f32
      %213 = vector.broadcast %cst_87 : f32 to vector<16x1xf32>
      %214 = arith.divf %212, %213 : vector<16x1xf32>
      %215 = vector.broadcast %207 : vector<16x1xf32> to vector<16x32xf32>
      %216 = arith.subf %201, %215 : vector<16x32xf32>
      %cst_88 = arith.constant 9.99999996E-13 : f32
      %217 = vector.broadcast %cst_88 : f32 to vector<16x1xf32>
      %218 = arith.addf %214, %217 : vector<16x1xf32>
      %219 = math.rsqrt %218 : vector<16x1xf32>
      %220 = vector.broadcast %219 : vector<16x1xf32> to vector<16x32xf32>
      %221 = arith.mulf %216, %220 : vector<16x32xf32>
      %222 = vector.broadcast %202 : vector<1x32xf32> to vector<16x32xf32>
      %223 = arith.mulf %221, %222 : vector<16x32xf32>
      %224 = vector.broadcast %203 : vector<1x32xf32> to vector<16x32xf32>
      %225 = arith.addf %223, %224 : vector<16x32xf32>
      %c0_89 = arith.constant 0 : index
      %c0_90 = arith.constant 0 : index
      %226 = vector.load %arg12[%c0_89, %c0_90] : memref<16x32xf32, #tpu.memory_space<vmem>>, vector<16x32xf32>
      tpu.vector_store %arg12[%c0_89, %c0_90], %225 {strides = array<i32>} : memref<16x32xf32, #tpu.memory_space<vmem>>, vector<16x32xf32>,
    } else {
    }
    %c0 = arith.constant 0 : index
    %c0_1 = arith.constant 0 : index
    %3 = vector.load %arg12[%c0, %c0_1] : memref<16x32xf32, #tpu.memory_space<vmem>>, vector<16x32xf32>
    %c0_2 = arith.constant 0 : index
    %c0_3 = arith.constant 0 : index
    %4 = vector.load %arg2[%c0_2, %c0_3] : memref<2x8xf32, #tpu.memory_space<vmem>>, vector<2x8xf32>
    %cst = arith.constant 1.000000e+00 : f32
    %5 = vector.broadcast %cst : f32 to vector<2x8xf32>
    %6 = arith.subf %4, %5 : vector<2x8xf32>
    %cst_4 = arith.constant 1.000000e+09 : f32
    %7 = vector.broadcast %cst_4 : f32 to vector<2x8xf32>
    %8 = arith.mulf %6, %7 : vector<2x8xf32>
    %9 = vector.shape_cast %8 : vector<2x8xf32> to vector<2x1x8xf32>
    %10 = arith.truncf %3 : vector<16x32xf32> to vector<16x32xbf16>
    %c0_5 = arith.constant 0 : index
    %c0_6 = arith.constant 0 : index
    %c0_7 = arith.constant 0 : index
    %11 = vector.load %arg4[%c0_5, %c0_6, %c0_7] : memref<1x32x96xbf16, #tpu.memory_space<vmem>>, vector<1x32x96xbf16>
    %12 = vector.shape_cast %11 : vector<1x32x96xbf16> to vector<32x96xbf16>
    %cst_8 = arith.constant dense<0.000000e+00> : vector<16x96xf32>
    %13 = tpu.matmul %10, %12, %cst_8 {dimension_numbers = #tpu.dot_dimension_numbers<[1], [0], [0], [1], [0, 0, 1, 1], [], []>} : vector<16x32xbf16>, vector<32x96xbf16>, vector<16x96xf32> -> vector<16x96xf32>
    %c0_9 = arith.constant 0 : index
    %c0_10 = arith.constant 0 : index
    %c0_11 = arith.constant 0 : index
    %14 = vector.load %arg5[%c0_9, %c0_10, %c0_11] : memref<1x1x96xf32, #tpu.memory_space<vmem>>, vector<1x1x96xf32>
    %15 = vector.shape_cast %14 : vector<1x1x96xf32> to vector<1x96xf32>
    %16 = vector.broadcast %15 : vector<1x96xf32> to vector<16x96xf32>
    %17 = arith.addf %13, %16 : vector<16x96xf32>
    %18 = vector.extract_strided_slice %17 {offsets = [0, 0], sizes = [16, 8], strides = [1, 1]} : vector<16x96xf32> to vector<16x8xf32>
    %19 = vector.shape_cast %18 : vector<16x8xf32> to vector<2x8x8xf32>
    %20 = vector.extract_strided_slice %17 {offsets = [0, 32], sizes = [16, 8], strides = [1, 1]} : vector<16x96xf32> to vector<16x8xf32>
    %21 = vector.shape_cast %20 : vector<16x8xf32> to vector<2x8x8xf32>
    %22 = vector.extract_strided_slice %17 {offsets = [0, 64], sizes = [16, 8], strides = [1, 1]} : vector<16x96xf32> to vector<16x8xf32>
    %23 = vector.shape_cast %22 : vector<16x8xf32> to vector<2x8x8xf32>
    "tpu.trace_start"() <{level = 10 : i32, message = "bqd,bkd->bqk"}> : () -> ()
    %cst_12 = arith.constant dense<0.000000e+00> : vector<2x8x8xf32>
    %24 = tpu.matmul %19, %21, %cst_12 {dimension_numbers = #tpu.dot_dimension_numbers<[2], [2], [1], [1], [0, 0, 0, 1, 1, 1], [0], [0]>} : vector<2x8x8xf32>, vector<2x8x8xf32>, vector<2x8x8xf32> -> vector<2x8x8xf32>
    "tpu.trace_stop"() : () -> ()
    %cst_13 = arith.constant 0.353553385 : f32
    %25 = vector.broadcast %cst_13 : f32 to vector<2x8x8xf32>
    %26 = arith.mulf %24, %25 : vector<2x8x8xf32>
    %27 = vector.broadcast %9 : vector<2x1x8xf32> to vector<2x8x8xf32>
    %28 = arith.addf %26, %27 : vector<2x8x8xf32>
    %cst_14 = arith.constant dense<0xFF800000> : vector<2x8xf32>
    %29 = vector.multi_reduction <maximumf>, %28, %cst_14 [2] : vector<2x8x8xf32> to vector<2x8xf32>
    %30 = vector.shape_cast %29 : vector<2x8xf32> to vector<2x8x1xf32>
    %31 = vector.broadcast %30 : vector<2x8x1xf32> to vector<2x8x8xf32>
    %32 = arith.subf %28, %31 : vector<2x8x8xf32>
    %33 = math.exp %32 : vector<2x8x8xf32>
    %cst_15 = arith.constant dense<0.000000e+00> : vector<2x8xf32>
    %34 = vector.multi_reduction <add>, %33, %cst_15 [2] : vector<2x8x8xf32> to vector<2x8xf32>
    %35 = vector.shape_cast %34 : vector<2x8xf32> to vector<2x8x1xf32>
    %36 = tpu.reciprocal %35 {approx = true} : vector<2x8x1xf32> -> vector<2x8x1xf32>
    %37 = vector.broadcast %36 : vector<2x8x1xf32> to vector<2x8x8xf32>
    %38 = arith.mulf %33, %37 : vector<2x8x8xf32>
    "tpu.trace_start"() <{level = 10 : i32, message = "bqk,bkd->bqd"}> : () -> ()
    %cst_16 = arith.constant dense<0.000000e+00> : vector<2x8x8xf32>
    %39 = tpu.matmul %38, %23, %cst_16 {dimension_numbers = #tpu.dot_dimension_numbers<[2], [1], [1], [2], [0, 0, 0, 1, 1, 2], [0], [0]>} : vector<2x8x8xf32>, vector<2x8x8xf32>, vector<2x8x8xf32> -> vector<2x8x8xf32>
    "tpu.trace_stop"() : () -> ()
    %40 = vector.extract_strided_slice %17 {offsets = [0, 8], sizes = [16, 8], strides = [1, 1]} : vector<16x96xf32> to vector<16x8xf32>
    %41 = vector.shape_cast %40 : vector<16x8xf32> to vector<2x8x8xf32>
    %42 = vector.extract_strided_slice %17 {offsets = [0, 40], sizes = [16, 8], strides = [1, 1]} : vector<16x96xf32> to vector<16x8xf32>
    %43 = vector.shape_cast %42 : vector<16x8xf32> to vector<2x8x8xf32>
    %44 = vector.extract_strided_slice %17 {offsets = [0, 72], sizes = [16, 8], strides = [1, 1]} : vector<16x96xf32> to vector<16x8xf32>
    %45 = vector.shape_cast %44 : vector<16x8xf32> to vector<2x8x8xf32>
    "tpu.trace_start"() <{level = 10 : i32, message = "bqd,bkd->bqk"}> : () -> ()
    %cst_17 = arith.constant dense<0.000000e+00> : vector<2x8x8xf32>
    %46 = tpu.matmul %41, %43, %cst_17 {dimension_numbers = #tpu.dot_dimension_numbers<[2], [2], [1], [1], [0, 0, 0, 1, 1, 1], [0], [0]>} : vector<2x8x8xf32>, vector<2x8x8xf32>, vector<2x8x8xf32> -> vector<2x8x8xf32>
    "tpu.trace_stop"() : () -> ()
    %cst_18 = arith.constant 0.353553385 : f32
    %47 = vector.broadcast %cst_18 : f32 to vector<2x8x8xf32>
    %48 = arith.mulf %46, %47 : vector<2x8x8xf32>
    %49 = vector.broadcast %9 : vector<2x1x8xf32> to vector<2x8x8xf32>
    %50 = arith.addf %48, %49 : vector<2x8x8xf32>
    %cst_19 = arith.constant dense<0xFF800000> : vector<2x8xf32>
    %51 = vector.multi_reduction <maximumf>, %50, %cst_19 [2] : vector<2x8x8xf32> to vector<2x8xf32>
    %52 = vector.shape_cast %51 : vector<2x8xf32> to vector<2x8x1xf32>
    %53 = vector.broadcast %52 : vector<2x8x1xf32> to vector<2x8x8xf32>
    %54 = arith.subf %50, %53 : vector<2x8x8xf32>
    %55 = math.exp %54 : vector<2x8x8xf32>
    %cst_20 = arith.constant dense<0.000000e+00> : vector<2x8xf32>
    %56 = vector.multi_reduction <add>, %55, %cst_20 [2] : vector<2x8x8xf32> to vector<2x8xf32>
    %57 = vector.shape_cast %56 : vector<2x8xf32> to vector<2x8x1xf32>
    %58 = tpu.reciprocal %57 {approx = true} : vector<2x8x1xf32> -> vector<2x8x1xf32>
    %59 = vector.broadcast %58 : vector<2x8x1xf32> to vector<2x8x8xf32>
    %60 = arith.mulf %55, %59 : vector<2x8x8xf32>
    "tpu.trace_start"() <{level = 10 : i32, message = "bqk,bkd->bqd"}> : () -> ()
    %cst_21 = arith.constant dense<0.000000e+00> : vector<2x8x8xf32>
    %61 = tpu.matmul %60, %45, %cst_21 {dimension_numbers = #tpu.dot_dimension_numbers<[2], [1], [1], [2], [0, 0, 0, 1, 1, 2], [0], [0]>} : vector<2x8x8xf32>, vector<2x8x8xf32>, vector<2x8x8xf32> -> vector<2x8x8xf32>
    "tpu.trace_stop"() : () -> ()
    %62 = vector.extract_strided_slice %17 {offsets = [0, 16], sizes = [16, 8], strides = [1, 1]} : vector<16x96xf32> to vector<16x8xf32>
    %63 = vector.shape_cast %62 : vector<16x8xf32> to vector<2x8x8xf32>
    %64 = vector.extract_strided_slice %17 {offsets = [0, 48], sizes = [16, 8], strides = [1, 1]} : vector<16x96xf32> to vector<16x8xf32>
    %65 = vector.shape_cast %64 : vector<16x8xf32> to vector<2x8x8xf32>
    %66 = vector.extract_strided_slice %17 {offsets = [0, 80], sizes = [16, 8], strides = [1, 1]} : vector<16x96xf32> to vector<16x8xf32>
    %67 = vector.shape_cast %66 : vector<16x8xf32> to vector<2x8x8xf32>
    "tpu.trace_start"() <{level = 10 : i32, message = "bqd,bkd->bqk"}> : () -> ()
    %cst_22 = arith.constant dense<0.000000e+00> : vector<2x8x8xf32>
    %68 = tpu.matmul %63, %65, %cst_22 {dimension_numbers = #tpu.dot_dimension_numbers<[2], [2], [1], [1], [0, 0, 0, 1, 1, 1], [0], [0]>} : vector<2x8x8xf32>, vector<2x8x8xf32>, vector<2x8x8xf32> -> vector<2x8x8xf32>
    "tpu.trace_stop"() : () -> ()
    %cst_23 = arith.constant 0.353553385 : f32
    %69 = vector.broadcast %cst_23 : f32 to vector<2x8x8xf32>
    %70 = arith.mulf %68, %69 : vector<2x8x8xf32>
    %71 = vector.broadcast %9 : vector<2x1x8xf32> to vector<2x8x8xf32>
    %72 = arith.addf %70, %71 : vector<2x8x8xf32>
    %cst_24 = arith.constant dense<0xFF800000> : vector<2x8xf32>
    %73 = vector.multi_reduction <maximumf>, %72, %cst_24 [2] : vector<2x8x8xf32> to vector<2x8xf32>
    %74 = vector.shape_cast %73 : vector<2x8xf32> to vector<2x8x1xf32>
    %75 = vector.broadcast %74 : vector<2x8x1xf32> to vector<2x8x8xf32>
    %76 = arith.subf %72, %75 : vector<2x8x8xf32>
    %77 = math.exp %76 : vector<2x8x8xf32>
    %cst_25 = arith.constant dense<0.000000e+00> : vector<2x8xf32>
    %78 = vector.multi_reduction <add>, %77, %cst_25 [2] : vector<2x8x8xf32> to vector<2x8xf32>
    %79 = vector.shape_cast %78 : vector<2x8xf32> to vector<2x8x1xf32>
    %80 = tpu.reciprocal %79 {approx = true} : vector<2x8x1xf32> -> vector<2x8x1xf32>
    %81 = vector.broadcast %80 : vector<2x8x1xf32> to vector<2x8x8xf32>
    %82 = arith.mulf %77, %81 : vector<2x8x8xf32>
    "tpu.trace_start"() <{level = 10 : i32, message = "bqk,bkd->bqd"}> : () -> ()
    %cst_26 = arith.constant dense<0.000000e+00> : vector<2x8x8xf32>
    %83 = tpu.matmul %82, %67, %cst_26 {dimension_numbers = #tpu.dot_dimension_numbers<[2], [1], [1], [2], [0, 0, 0, 1, 1, 2], [0], [0]>} : vector<2x8x8xf32>, vector<2x8x8xf32>, vector<2x8x8xf32> -> vector<2x8x8xf32>
    "tpu.trace_stop"() : () -> ()
    %84 = vector.extract_strided_slice %17 {offsets = [0, 24], sizes = [16, 8], strides = [1, 1]} : vector<16x96xf32> to vector<16x8xf32>
    %85 = vector.shape_cast %84 : vector<16x8xf32> to vector<2x8x8xf32>
    %86 = vector.extract_strided_slice %17 {offsets = [0, 56], sizes = [16, 8], strides = [1, 1]} : vector<16x96xf32> to vector<16x8xf32>
    %87 = vector.shape_cast %86 : vector<16x8xf32> to vector<2x8x8xf32>
    %88 = vector.extract_strided_slice %17 {offsets = [0, 88], sizes = [16, 8], strides = [1, 1]} : vector<16x96xf32> to vector<16x8xf32>
    %89 = vector.shape_cast %88 : vector<16x8xf32> to vector<2x8x8xf32>
    "tpu.trace_start"() <{level = 10 : i32, message = "bqd,bkd->bqk"}> : () -> ()
    %cst_27 = arith.constant dense<0.000000e+00> : vector<2x8x8xf32>
    %90 = tpu.matmul %85, %87, %cst_27 {dimension_numbers = #tpu.dot_dimension_numbers<[2], [2], [1], [1], [0, 0, 0, 1, 1, 1], [0], [0]>} : vector<2x8x8xf32>, vector<2x8x8xf32>, vector<2x8x8xf32> -> vector<2x8x8xf32>
    "tpu.trace_stop"() : () -> ()
    %cst_28 = arith.constant 0.353553385 : f32
    %91 = vector.broadcast %cst_28 : f32 to vector<2x8x8xf32>
    %92 = arith.mulf %90, %91 : vector<2x8x8xf32>
    %93 = vector.broadcast %9 : vector<2x1x8xf32> to vector<2x8x8xf32>
    %94 = arith.addf %92, %93 : vector<2x8x8xf32>
    %cst_29 = arith.constant dense<0xFF800000> : vector<2x8xf32>
    %95 = vector.multi_reduction <maximumf>, %94, %cst_29 [2] : vector<2x8x8xf32> to vector<2x8xf32>
    %96 = vector.shape_cast %95 : vector<2x8xf32> to vector<2x8x1xf32>
    %97 = vector.broadcast %96 : vector<2x8x1xf32> to vector<2x8x8xf32>
    %98 = arith.subf %94, %97 : vector<2x8x8xf32>
    %99 = math.exp %98 : vector<2x8x8xf32>
    %cst_30 = arith.constant dense<0.000000e+00> : vector<2x8xf32>
    %100 = vector.multi_reduction <add>, %99, %cst_30 [2] : vector<2x8x8xf32> to vector<2x8xf32>
    %101 = vector.shape_cast %100 : vector<2x8xf32> to vector<2x8x1xf32>
    %102 = tpu.reciprocal %101 {approx = true} : vector<2x8x1xf32> -> vector<2x8x1xf32>
    %103 = vector.broadcast %102 : vector<2x8x1xf32> to vector<2x8x8xf32>
    %104 = arith.mulf %99, %103 : vector<2x8x8xf32>
    "tpu.trace_start"() <{level = 10 : i32, message = "bqk,bkd->bqd"}> : () -> ()
    %cst_31 = arith.constant dense<0.000000e+00> : vector<2x8x8xf32>
    %105 = tpu.matmul %104, %89, %cst_31 {dimension_numbers = #tpu.dot_dimension_numbers<[2], [1], [1], [2], [0, 0, 0, 1, 1, 2], [0], [0]>} : vector<2x8x8xf32>, vector<2x8x8xf32>, vector<2x8x8xf32> -> vector<2x8x8xf32>
    "tpu.trace_stop"() : () -> ()
    %106 = tpu.concatenate %39, %61, %83, %105 in 2 : vector<2x8x8xf32>, vector<2x8x8xf32>, vector<2x8x8xf32>, vector<2x8x8xf32> -> vector<2x8x32xf32>
    %107 = vector.shape_cast %106 : vector<2x8x32xf32> to vector<16x32xf32>
    %108 = arith.truncf %107 : vector<16x32xf32> to vector<16x32xbf16>
    %c0_32 = arith.constant 0 : index
    %c0_33 = arith.constant 0 : index
    %c0_34 = arith.constant 0 : index
    %109 = vector.load %arg6[%c0_32, %c0_33, %c0_34] : memref<1x32x32xbf16, #tpu.memory_space<vmem>>, vector<1x32x32xbf16>
    %110 = vector.shape_cast %109 : vector<1x32x32xbf16> to vector<32x32xbf16>
    %cst_35 = arith.constant dense<0.000000e+00> : vector<16x32xf32>
    %111 = tpu.matmul %108, %110, %cst_35 {dimension_numbers = #tpu.dot_dimension_numbers<[1], [0], [0], [1], [0, 0, 1, 1], [], []>} : vector<16x32xbf16>, vector<32x32xbf16>, vector<16x32xf32> -> vector<16x32xf32>
    %c0_36 = arith.constant 0 : index
    %c0_37 = arith.constant 0 : index
    %c0_38 = arith.constant 0 : index
    %112 = vector.load %arg10[%c0_36, %c0_37, %c0_38] : memref<1x6x32xf32, #tpu.memory_space<vmem>>, vector<1x1x32xf32>
    %113 = vector.shape_cast %112 : vector<1x1x32xf32> to vector<1x32xf32>
    %114 = vector.broadcast %113 : vector<1x32xf32> to vector<16x32xf32>
    %115 = arith.addf %111, %114 : vector<16x32xf32>
    %116 = arith.addf %3, %115 : vector<16x32xf32>
    %c0_39 = arith.constant 0 : index
    %c2 = arith.constant 2 : index
    %c0_40 = arith.constant 0 : index
    %117 = vector.load %arg10[%c0_39, %c2, %c0_40] : memref<1x6x32xf32, #tpu.memory_space<vmem>>, vector<1x1x32xf32>
    %118 = vector.shape_cast %117 : vector<1x1x32xf32> to vector<1x32xf32>
    %c0_41 = arith.constant 0 : index
    %c3 = arith.constant 3 : index
    %c0_42 = arith.constant 0 : index
    %119 = vector.load %arg10[%c0_41, %c3, %c0_42] : memref<1x6x32xf32, #tpu.memory_space<vmem>>, vector<1x1x32xf32>
    %120 = vector.shape_cast %119 : vector<1x1x32xf32> to vector<1x32xf32>
    %cst_43 = arith.constant dense<0.000000e+00> : vector<16xf32>
    %121 = vector.multi_reduction <add>, %116, %cst_43 [1] : vector<16x32xf32> to vector<16xf32>
    %122 = vector.shape_cast %121 : vector<16xf32> to vector<16x1xf32>
    %cst_44 = arith.constant 3.200000e+01 : f32
    %123 = vector.broadcast %cst_44 : f32 to vector<16x1xf32>
    %124 = arith.divf %122, %123 : vector<16x1xf32>
    %125 = vector.broadcast %124 : vector<16x1xf32> to vector<16x32xf32>
    %126 = arith.subf %116, %125 : vector<16x32xf32>
    %127 = arith.mulf %126, %126 : vector<16x32xf32>
    %cst_45 = arith.constant dense<0.000000e+00> : vector<16xf32>
    %128 = vector.multi_reduction <add>, %127, %cst_45 [1] : vector<16x32xf32> to vector<16xf32>
    %129 = vector.shape_cast %128 : vector<16xf32> to vector<16x1xf32>
    %cst_46 = arith.constant 3.200000e+01 : f32
    %130 = vector.broadcast %cst_46 : f32 to vector<16x1xf32>
    %131 = arith.divf %129, %130 : vector<16x1xf32>
    %132 = vector.broadcast %124 : vector<16x1xf32> to vector<16x32xf32>
    %133 = arith.subf %116, %132 : vector<16x32xf32>
    %cst_47 = arith.constant 9.99999996E-13 : f32
    %134 = vector.broadcast %cst_47 : f32 to vector<16x1xf32>
    %135 = arith.addf %131, %134 : vector<16x1xf32>
    %136 = math.rsqrt %135 : vector<16x1xf32>
    %137 = vector.broadcast %136 : vector<16x1xf32> to vector<16x32xf32>
    %138 = arith.mulf %133, %137 : vector<16x32xf32>
    %139 = vector.broadcast %118 : vector<1x32xf32> to vector<16x32xf32>
    %140 = arith.mulf %138, %139 : vector<16x32xf32>
    %141 = vector.broadcast %120 : vector<1x32xf32> to vector<16x32xf32>
    %142 = arith.addf %140, %141 : vector<16x32xf32>
    %143 = arith.truncf %142 : vector<16x32xf32> to vector<16x32xbf16>
    %c0_48 = arith.constant 0 : index
    %c0_49 = arith.constant 0 : index
    %c0_50 = arith.constant 0 : index
    %144 = vector.load %arg7[%c0_48, %c0_49, %c0_50] : memref<1x32x128xbf16, #tpu.memory_space<vmem>>, vector<1x32x128xbf16>
    %145 = vector.shape_cast %144 : vector<1x32x128xbf16> to vector<32x128xbf16>
    %cst_51 = arith.constant dense<0.000000e+00> : vector<16x128xf32>
    %146 = tpu.matmul %143, %145, %cst_51 {dimension_numbers = #tpu.dot_dimension_numbers<[1], [0], [0], [1], [0, 0, 1, 1], [], []>} : vector<16x32xbf16>, vector<32x128xbf16>, vector<16x128xf32> -> vector<16x128xf32>
    %c0_52 = arith.constant 0 : index
    %c0_53 = arith.constant 0 : index
    %c0_54 = arith.constant 0 : index
    %147 = vector.load %arg8[%c0_52, %c0_53, %c0_54] : memref<1x1x128xf32, #tpu.memory_space<vmem>>, vector<1x1x128xf32>
    %148 = vector.shape_cast %147 : vector<1x1x128xf32> to vector<1x128xf32>
    %149 = vector.broadcast %148 : vector<1x128xf32> to vector<16x128xf32>
    %150 = arith.addf %146, %149 : vector<16x128xf32>
    %151 = arith.mulf %150, %150 : vector<16x128xf32>
    %152 = arith.mulf %150, %151 : vector<16x128xf32>
    %cst_55 = arith.constant 4.471500e-02 : f32
    %153 = vector.broadcast %cst_55 : f32 to vector<16x128xf32>
    %154 = arith.mulf %153, %152 : vector<16x128xf32>
    %155 = arith.addf %150, %154 : vector<16x128xf32>
    %cst_56 = arith.constant 0.797884583 : f32
    %156 = vector.broadcast %cst_56 : f32 to vector<16x128xf32>
    %157 = arith.mulf %156, %155 : vector<16x128xf32>
    %158 = math.tanh %157 : vector<16x128xf32>
    %cst_57 = arith.constant 1.000000e+00 : f32
    %159 = vector.broadcast %cst_57 : f32 to vector<16x128xf32>
    %160 = arith.addf %159, %158 : vector<16x128xf32>
    %cst_58 = arith.constant 5.000000e-01 : f32
    %161 = vector.broadcast %cst_58 : f32 to vector<16x128xf32>
    %162 = arith.mulf %161, %160 : vector<16x128xf32>
    %163 = arith.mulf %150, %162 : vector<16x128xf32>
    %164 = arith.truncf %163 : vector<16x128xf32> to vector<16x128xbf16>
    %c0_59 = arith.constant 0 : index
    %c0_60 = arith.constant 0 : index
    %c0_61 = arith.constant 0 : index
    %165 = vector.load %arg9[%c0_59, %c0_60, %c0_61] : memref<1x128x32xbf16, #tpu.memory_space<vmem>>, vector<1x128x32xbf16>
    %166 = vector.shape_cast %165 : vector<1x128x32xbf16> to vector<128x32xbf16>
    %cst_62 = arith.constant dense<0.000000e+00> : vector<16x32xf32>
    %167 = tpu.matmul %164, %166, %cst_62 {dimension_numbers = #tpu.dot_dimension_numbers<[1], [0], [0], [1], [0, 0, 1, 1], [], []>} : vector<16x128xbf16>, vector<128x32xbf16>, vector<16x32xf32> -> vector<16x32xf32>
    %c0_63 = arith.constant 0 : index
    %c1 = arith.constant 1 : index
    %c0_64 = arith.constant 0 : index
    %168 = vector.load %arg10[%c0_63, %c1, %c0_64] : memref<1x6x32xf32, #tpu.memory_space<vmem>>, vector<1x1x32xf32>
    %169 = vector.shape_cast %168 : vector<1x1x32xf32> to vector<1x32xf32>
    %170 = vector.broadcast %169 : vector<1x32xf32> to vector<16x32xf32>
    %171 = arith.addf %167, %170 : vector<16x32xf32>
    %172 = arith.addf %142, %171 : vector<16x32xf32>
    %c0_65 = arith.constant 0 : index
    %c4 = arith.constant 4 : index
    %c0_66 = arith.constant 0 : index
    %173 = vector.load %arg10[%c0_65, %c4, %c0_66] : memref<1x6x32xf32, #tpu.memory_space<vmem>>, vector<1x1x32xf32>
    %174 = vector.shape_cast %173 : vector<1x1x32xf32> to vector<1x32xf32>
    %c0_67 = arith.constant 0 : index
    %c5 = arith.constant 5 : index
    %c0_68 = arith.constant 0 : index
    %175 = vector.load %arg10[%c0_67, %c5, %c0_68] : memref<1x6x32xf32, #tpu.memory_space<vmem>>, vector<1x1x32xf32>
    %176 = vector.shape_cast %175 : vector<1x1x32xf32> to vector<1x32xf32>
    %cst_69 = arith.constant dense<0.000000e+00> : vector<16xf32>
    %177 = vector.multi_reduction <add>, %172, %cst_69 [1] : vector<16x32xf32> to vector<16xf32>
    %178 = vector.shape_cast %177 : vector<16xf32> to vector<16x1xf32>
    %cst_70 = arith.constant 3.200000e+01 : f32
    %179 = vector.broadcast %cst_70 : f32 to vector<16x1xf32>
    %180 = arith.divf %178, %179 : vector<16x1xf32>
    %181 = vector.broadcast %180 : vector<16x1xf32> to vector<16x32xf32>
    %182 = arith.subf %172, %181 : vector<16x32xf32>
    %183 = arith.mulf %182, %182 : vector<16x32xf32>
    %cst_71 = arith.constant dense<0.000000e+00> : vector<16xf32>
    %184 = vector.multi_reduction <add>, %183, %cst_71 [1] : vector<16x32xf32> to vector<16xf32>
    %185 = vector.shape_cast %184 : vector<16xf32> to vector<16x1xf32>
    %cst_72 = arith.constant 3.200000e+01 : f32
    %186 = vector.broadcast %cst_72 : f32 to vector<16x1xf32>
    %187 = arith.divf %185, %186 : vector<16x1xf32>
    %188 = vector.broadcast %180 : vector<16x1xf32> to vector<16x32xf32>
    %189 = arith.subf %172, %188 : vector<16x32xf32>
    %cst_73 = arith.constant 9.99999996E-13 : f32
    %190 = vector.broadcast %cst_73 : f32 to vector<16x1xf32>
    %191 = arith.addf %187, %190 : vector<16x1xf32>
    %192 = math.rsqrt %191 : vector<16x1xf32>
    %193 = vector.broadcast %192 : vector<16x1xf32> to vector<16x32xf32>
    %194 = arith.mulf %189, %193 : vector<16x32xf32>
    %195 = vector.broadcast %174 : vector<1x32xf32> to vector<16x32xf32>
    %196 = arith.mulf %194, %195 : vector<16x32xf32>
    %197 = vector.broadcast %176 : vector<1x32xf32> to vector<16x32xf32>
    %198 = arith.addf %196, %197 : vector<16x32xf32>
    %c0_74 = arith.constant 0 : index
    %c0_75 = arith.constant 0 : index
    %199 = vector.load %arg12[%c0_74, %c0_75] : memref<16x32xf32, #tpu.memory_space<vmem>>, vector<16x32xf32>
    tpu.vector_store %arg12[%c0_74, %c0_75], %198 {strides = array<i32>} : memref<16x32xf32, #tpu.memory_space<vmem>>, vector<16x32xf32>,
    %c0_76 = arith.constant 0 : index
    %c0_77 = arith.constant 0 : index
    %200 = vector.load %arg11[%c0_76, %c0_77] : memref<16x32xf32, #tpu.memory_space<vmem>>, vector<16x32xf32>
    tpu.vector_store %arg11[%c0_76, %c0_77], %198 {strides = array<i32>} : memref<16x32xf32, #tpu.memory_space<vmem>>, vector<16x32xf32>,
    return
  }
  func.func @transform_0(%arg0: i32) -> (i32, i32) {
    %c0_i32 = arith.constant 0 : i32
    %c0_i32_0 = arith.constant 0 : i32
    %c0_i32_1 = arith.constant 0 : i32
    return %c0_i32, %c0_i32_0 : i32, i32
  }
  func.func @transform_1(%arg0: i32) -> (i32, i32) {
    %c0_i32 = arith.constant 0 : i32
    %c0_i32_0 = arith.constant 0 : i32
    %c0_i32_1 = arith.constant 0 : i32
    return %c0_i32, %c0_i32_0 : i32, i32
  }
  func.func @transform_2(%arg0: i32) -> (i32, i32) {
    %c0_i32 = arith.constant 0 : i32
    %c0_i32_0 = arith.constant 0 : i32
    %c0_i32_1 = arith.constant 0 : i32
    return %c0_i32, %c0_i32_0 : i32, i32
  }
  func.func @transform_3(%arg0: i32) -> (i32, i32, i32) {
    %c0_i32 = arith.constant 0 : i32
    %c0_i32_0 = arith.constant 0 : i32
    %c0_i32_1 = arith.constant 0 : i32
    return %arg0, %c0_i32, %c0_i32_0 : i32, i32, i32
  }
  func.func @transform_4(%arg0: i32) -> (i32, i32, i32) {
    %c0_i32 = arith.constant 0 : i32
    %c0_i32_0 = arith.constant 0 : i32
    %c0_i32_1 = arith.constant 0 : i32
    return %arg0, %c0_i32, %c0_i32_0 : i32, i32, i32
  }
  func.func @transform_5(%arg0: i32) -> (i32, i32, i32) {
    %c0_i32 = arith.constant 0 : i32
    %c0_i32_0 = arith.constant 0 : i32
    %c0_i32_1 = arith.constant 0 : i32
    return %arg0, %c0_i32, %c0_i32_0 : i32, i32, i32
  }
  func.func @transform_6(%arg0: i32) -> (i32, i32, i32) {
    %c0_i32 = arith.constant 0 : i32
    %c0_i32_0 = arith.constant 0 : i32
    %c0_i32_1 = arith.constant 0 : i32
    return %arg0, %c0_i32, %c0_i32_0 : i32, i32, i32
  }
  func.func @transform_7(%arg0: i32) -> (i32, i32, i32) {
    %c0_i32 = arith.constant 0 : i32
    %c0_i32_0 = arith.constant 0 : i32
    %c0_i32_1 = arith.constant 0 : i32
    return %arg0, %c0_i32, %c0_i32_0 : i32, i32, i32
  }
  func.func @transform_8(%arg0: i32) -> (i32, i32, i32) {
    %c0_i32 = arith.constant 0 : i32
    %c0_i32_0 = arith.constant 0 : i32
    %c0_i32_1 = arith.constant 0 : i32
    return %arg0, %c0_i32, %c0_i32_0 : i32, i32, i32
  }
  func.func @transform_9(%arg0: i32) -> (i32, i32, i32) {
    %c0_i32 = arith.constant 0 : i32
    %c0_i32_0 = arith.constant 0 : i32
    %c0_i32_1 = arith.constant 0 : i32
    return %arg0, %c0_i32, %c0_i32_0 : i32, i32, i32
  }
  func.func @transform_10(%arg0: i32) -> (i32, i32) {
    %c0_i32 = arith.constant 0 : i32
    %c0_i32_0 = arith.constant 0 : i32
    %c0_i32_1 = arith.constant 0 : i32
    return %c0_i32, %c0_i32_0 : i32, i32
  }
}

</mosaic_0001>

<llo_original>
// kernel: tpu_custom_call.1
$region0: #{tpu_custom_call.1}
  #allocation0 [shape = 'u32[]', space=smem, size = 0x4, offset = 0x4, fixed_abs, tag = 'smem constant byte address 0x4 - core index']
  #allocation1 [shape = 'u32[144,128]{1,0:T(1,128)}', space=vmem, size = 0x12000, scoped, tag = 'internal scratch']
  #allocation2 [shape = 'f32[16,32]{1,0:T(8,128)}', space=vmem, size = 0x2000, scoped, tag = 'scratch operand']
  %s0 = inlined_call_operand.vmem [shape: f32[16,32], index: 0, kind: input, shape index: {}]
  %s1 = inlined_call_operand.vmem [shape: f32[2,8], index: 1, kind: input, shape index: {}]
  %s2 = inlined_call_operand.vmem [shape: f32[2,32], index: 2, kind: input, shape index: {}]
  %s3 = inlined_call_operand.vmem [shape: bf16[2,32,96], index: 3, kind: input, shape index: {}]
  %s4 = inlined_call_operand.vmem [shape: f32[2,1,96], index: 4, kind: input, shape index: {}]
  %s5 = inlined_call_operand.vmem [shape: bf16[2,32,32], index: 5, kind: input, shape index: {}]
  %s6 = inlined_call_operand.vmem [shape: bf16[2,32,128], index: 6, kind: input, shape index: {}]
  %s7 = inlined_call_operand.vmem [shape: f32[2,1,128], index: 7, kind: input, shape index: {}]
  %s8 = inlined_call_operand.vmem [shape: bf16[2,128,32], index: 8, kind: input, shape index: {}]
  %s9 = inlined_call_operand.vmem [shape: f32[2,6,32], index: 9, kind: input, shape index: {}]
  %s10 = inlined_call_operand.hbm [shape: f32[16,32], index: 10, kind: output, shape index: {}]
  %s11 = sld [smem:[#allocation0]]
  $region77: #{tpu_custom_call.1} parent=0
    _
  %s13 = ssub.s32 1, %s11
  %s14 = scalar_select 0, %s13, %s11
  $region1: #{tpu_custom_call.1} parent=0
    #allocation3 [shape = 'u8[8192]{0}', space=vmem, size = 0x2000, scoped, tag = 'output window, operand 0, single buffered']
    #allocation4 [shape = 's32[2]{0}', space=sflag, size = 0x8, scoped, tag = 'scoped memory for tpu_custom_call.1']
    %15 = vsyncpa [#allocation4], 0
    loop: start=0, step=1, limit=4
    $region2: #{tpu_custom_call.1} parent=1 // loop_pre_header
      _
    $region3: #{tpu_custom_call.1} parent=1 // loop_header
      %s17 = sphi 0, %s21
      %p18 = scmp.ge.s32.totalorder %s17, 4
      %s25 = sphi 0, %s25
      %s27 = sphi 0, %s25
      %s28 = sphi 0, %s27
      %s42 = sphi 0, %s28
      %s46 = sphi 0, %s46
      %s48 = sphi 0, %s46
      %s49 = sphi 0, %s48
      %s63 = sphi 0, %s49
      %s67 = sphi 0, %s67
      %s69 = sphi 0, %s67
      %s70 = sphi 0, %s69
      %s84 = sphi 0, %s70
      %s90 = sphi 0, %s92
      %s93 = sphi 0, %s90
      %s94 = sphi 0, %s93
      %s110 = sphi 0, %s94
      %s116 = sphi 0, %s118
      %s119 = sphi 0, %s116
      %s120 = sphi 0, %s119
      %s136 = sphi 0, %s120
      %s142 = sphi 0, %s144
      %s145 = sphi 0, %s142
      %s146 = sphi 0, %s145
      %s162 = sphi 0, %s146
      %s168 = sphi 0, %s170
      %s171 = sphi 0, %s168
      %s172 = sphi 0, %s171
      %s188 = sphi 0, %s172
      %s194 = sphi 0, %s196
      %s197 = sphi 0, %s194
      %s198 = sphi 0, %s197
      %s214 = sphi 0, %s198
      %s220 = sphi 0, %s222
      %s223 = sphi 0, %s220
      %s224 = sphi 0, %s223
      %s240 = sphi 0, %s224
      %s246 = sphi 0, %s248
      %s249 = sphi 0, %s246
      %s250 = sphi 0, %s249
      %s266 = sphi 0, %s250
      %s270 = sphi 0, %s270
      %s272 = sphi 0, %s270
      %s273 = sphi 0, %s272
      %s287 = sphi 0, %s273
    $region4: #{tpu_custom_call.1} parent=1 // loop_header_branch
      %20 = sbr.rel (%p18) target = $region8
    $region5: #{tpu_custom_call.1} parent=1 // loop_body
      %s22 = ssub.s32 %s17, 1
      %s23 = ssub.s32 %s17, 2
      %s24 = sadd.s32 %s17, 1
      %s26 = sadd.s32 %s25, 1
      %p29 = scmp.eq.s32.totalorder %s17, 1
      %p30 = scmp.ne.s32.totalorder %s25, %s27
      %p31 = scmp.eq.s32.totalorder %s17, 0
      %p32 = por %p30, %p31
      %p33 = scmp.ne.s32.totalorder %s25, %s27
      %p34 = scmp.eq.s32.totalorder %s22, 1
      %p35 = por %p33, %p34
      %p36 = scmp.ne.s32.totalorder %s27, %s28
      %p37 = scmp.eq.s32.totalorder %s22, 0
      %p38 = por %p36, %p37
      %p39 = scmp.ne.s32.totalorder %s27, %s28
      %p40 = scmp.eq.s32.totalorder %s23, 1
      %p41 = por %p39, %p40
      %p43 = scmp.ne.s32.totalorder %s28, %s42
      %p44 = scmp.eq.s32.totalorder %s23, 0
      %p45 = por %p43, %p44
      %s47 = sadd.s32 %s46, 1
      %p50 = scmp.eq.s32.totalorder %s17, 1
      %p51 = scmp.ne.s32.totalorder %s46, %s48
      %p52 = scmp.eq.s32.totalorder %s17, 0
      %p53 = por %p51, %p52
      %p54 = scmp.ne.s32.totalorder %s46, %s48
      %p55 = scmp.eq.s32.totalorder %s22, 1
      %p56 = por %p54, %p55
      %p57 = scmp.ne.s32.totalorder %s48, %s49
      %p58 = scmp.eq.s32.totalorder %s22, 0
      %p59 = por %p57, %p58
      %p60 = scmp.ne.s32.totalorder %s48, %s49
      %p61 = scmp.eq.s32.totalorder %s23, 1
      %p62 = por %p60, %p61
      %p64 = scmp.ne.s32.totalorder %s49, %s63
      %p65 = scmp.eq.s32.totalorder %s23, 0
      %p66 = por %p64, %p65
      %s68 = sadd.s32 %s67, 1
      %p71 = scmp.eq.s32.totalorder %s17, 1
      %p72 = scmp.ne.s32.totalorder %s67, %s69
      %p73 = scmp.eq.s32.totalorder %s17, 0
      %p74 = por %p72, %p73
      %p75 = scmp.ne.s32.totalorder %s67, %s69
      %p76 = scmp.eq.s32.totalorder %s22, 1
      %p77 = por %p75, %p76
      %p78 = scmp.ne.s32.totalorder %s69, %s70
      %p79 = scmp.eq.s32.totalorder %s22, 0
      %p80 = por %p78, %p79
      %p81 = scmp.ne.s32.totalorder %s69, %s70
      %p82 = scmp.eq.s32.totalorder %s23, 1
      %p83 = por %p81, %p82
      %p85 = scmp.ne.s32.totalorder %s70, %s84
      %p86 = scmp.eq.s32.totalorder %s23, 0
      %p87 = por %p85, %p86
      %s88 = ssub.s32 %s17, %s24
      %p89 = scmp.eq.s32.totalorder %s88, 0
      %s91 = sadd.s32 %s90, 1
      %s92 = scalar_select %p89, %s90, %s91
      %p95 = pneg %p89
      %p96 = scmp.eq.s32.totalorder %s17, 1
      %p97 = por %p95, %p96
      %p98 = scmp.ne.s32.totalorder %s90, %s93
      %p99 = scmp.eq.s32.totalorder %s17, 0
      %p100 = por %p98, %p99
      %p101 = scmp.ne.s32.totalorder %s90, %s93
      %p102 = scmp.eq.s32.totalorder %s22, 1
      %p103 = por %p101, %p102
      %p104 = scmp.ne.s32.totalorder %s93, %s94
      %p105 = scmp.eq.s32.totalorder %s22, 0
      %p106 = por %p104, %p105
      %p107 = scmp.ne.s32.totalorder %s93, %s94
      %p108 = scmp.eq.s32.totalorder %s23, 1
      %p109 = por %p107, %p108
      %p111 = scmp.ne.s32.totalorder %s94, %s110
      %p112 = scmp.eq.s32.totalorder %s23, 0
      %p113 = por %p111, %p112
      %s114 = ssub.s32 %s17, %s24
      %p115 = scmp.eq.s32.totalorder %s114, 0
      %s117 = sadd.s32 %s116, 1
      %s118 = scalar_select %p115, %s116, %s117
      %p121 = pneg %p115
      %p122 = scmp.eq.s32.totalorder %s17, 1
      %p123 = por %p121, %p122
      %p124 = scmp.ne.s32.totalorder %s116, %s119
      %p125 = scmp.eq.s32.totalorder %s17, 0
      %p126 = por %p124, %p125
      %p127 = scmp.ne.s32.totalorder %s116, %s119
      %p128 = scmp.eq.s32.totalorder %s22, 1
      %p129 = por %p127, %p128
      %p130 = scmp.ne.s32.totalorder %s119, %s120
      %p131 = scmp.eq.s32.totalorder %s22, 0
      %p132 = por %p130, %p131
      %p133 = scmp.ne.s32.totalorder %s119, %s120
      %p134 = scmp.eq.s32.totalorder %s23, 1
      %p135 = por %p133, %p134
      %p137 = scmp.ne.s32.totalorder %s120, %s136
      %p138 = scmp.eq.s32.totalorder %s23, 0
      %p139 = por %p137, %p138
      %s140 = ssub.s32 %s17, %s24
      %p141 = scmp.eq.s32.totalorder %s140, 0
      %s143 = sadd.s32 %s142, 1
      %s144 = scalar_select %p141, %s142, %s143
      %p147 = pneg %p141
      %p148 = scmp.eq.s32.totalorder %s17, 1
      %p149 = por %p147, %p148
      %p150 = scmp.ne.s32.totalorder %s142, %s145
      %p151 = scmp.eq.s32.totalorder %s17, 0
      %p152 = por %p150, %p151
      %p153 = scmp.ne.s32.totalorder %s142, %s145
      %p154 = scmp.eq.s32.totalorder %s22, 1
      %p155 = por %p153, %p154
      %p156 = scmp.ne.s32.totalorder %s145, %s146
      %p157 = scmp.eq.s32.totalorder %s22, 0
      %p158 = por %p156, %p157
      %p159 = scmp.ne.s32.totalorder %s145, %s146
      %p160 = scmp.eq.s32.totalorder %s23, 1
      %p161 = por %p159, %p160
      %p163 = scmp.ne.s32.totalorder %s146, %s162
      %p164 = scmp.eq.s32.totalorder %s23, 0
      %p165 = por %p163, %p164
      %s166 = ssub.s32 %s17, %s24
      %p167 = scmp.eq.s32.totalorder %s166, 0
      %s169 = sadd.s32 %s168, 1
      %s170 = scalar_select %p167, %s168, %s169
      %p173 = pneg %p167
      %p174 = scmp.eq.s32.totalorder %s17, 1
      %p175 = por %p173, %p174
      %p176 = scmp.ne.s32.totalorder %s168, %s171
      %p177 = scmp.eq.s32.totalorder %s17, 0
      %p178 = por %p176, %p177
      %p179 = scmp.ne.s32.totalorder %s168, %s171
      %p180 = scmp.eq.s32.totalorder %s22, 1
      %p181 = por %p179, %p180
      %p182 = scmp.ne.s32.totalorder %s171, %s172
      %p183 = scmp.eq.s32.totalorder %s22, 0
      %p184 = por %p182, %p183
      %p185 = scmp.ne.s32.totalorder %s171, %s172
      %p186 = scmp.eq.s32.totalorder %s23, 1
      %p187 = por %p185, %p186
      %p189 = scmp.ne.s32.totalorder %s172, %s188
      %p190 = scmp.eq.s32.totalorder %s23, 0
      %p191 = por %p189, %p190
      %s192 = ssub.s32 %s17, %s24
      %p193 = scmp.eq.s32.totalorder %s192, 0
      %s195 = sadd.s32 %s194, 1
      %s196 = scalar_select %p193, %s194, %s195
      %p199 = pneg %p193
      %p200 = scmp.eq.s32.totalorder %s17, 1
      %p201 = por %p199, %p200
      %p202 = scmp.ne.s32.totalorder %s194, %s197
      %p203 = scmp.eq.s32.totalorder %s17, 0
      %p204 = por %p202, %p203
      %p205 = scmp.ne.s32.totalorder %s194, %s197
      %p206 = scmp.eq.s32.totalorder %s22, 1
      %p207 = por %p205, %p206
      %p208 = scmp.ne.s32.totalorder %s197, %s198
      %p209 = scmp.eq.s32.totalorder %s22, 0
      %p210 = por %p208, %p209
      %p211 = scmp.ne.s32.totalorder %s197, %s198
      %p212 = scmp.eq.s32.totalorder %s23, 1
      %p213 = por %p211, %p212
      %p215 = scmp.ne.s32.totalorder %s198, %s214
      %p216 = scmp.eq.s32.totalorder %s23, 0
      %p217 = por %p215, %p216
      %s218 = ssub.s32 %s17, %s24
      %p219 = scmp.eq.s32.totalorder %s218, 0
      %s221 = sadd.s32 %s220, 1
      %s222 = scalar_select %p219, %s220, %s221
      %p225 = pneg %p219
      %p226 = scmp.eq.s32.totalorder %s17, 1
      %p227 = por %p225, %p226
      %p228 = scmp.ne.s32.totalorder %s220, %s223
      %p229 = scmp.eq.s32.totalorder %s17, 0
      %p230 = por %p228, %p229
      %p231 = scmp.ne.s32.totalorder %s220, %s223
      %p232 = scmp.eq.s32.totalorder %s22, 1
      %p233 = por %p231, %p232
      %p234 = scmp.ne.s32.totalorder %s223, %s224
      %p235 = scmp.eq.s32.totalorder %s22, 0
      %p236 = por %p234, %p235
      %p237 = scmp.ne.s32.totalorder %s223, %s224
      %p238 = scmp.eq.s32.totalorder %s23, 1
      %p239 = por %p237, %p238
      %p241 = scmp.ne.s32.totalorder %s224, %s240
      %p242 = scmp.eq.s32.totalorder %s23, 0
      %p243 = por %p241, %p242
      %s244 = ssub.s32 %s17, %s24
      %p245 = scmp.eq.s32.totalorder %s244, 0
      %s247 = sadd.s32 %s246, 1
      %s248 = scalar_select %p245, %s246, %s247
      %p251 = pneg %p245
      %p252 = scmp.eq.s32.totalorder %s17, 1
      %p253 = por %p251, %p252
      %p254 = scmp.ne.s32.totalorder %s246, %s249
      %p255 = scmp.eq.s32.totalorder %s17, 0
      %p256 = por %p254, %p255
      %p257 = scmp.ne.s32.totalorder %s246, %s249
      %p258 = scmp.eq.s32.totalorder %s22, 1
      %p259 = por %p257, %p258
      %p260 = scmp.ne.s32.totalorder %s249, %s250
      %p261 = scmp.eq.s32.totalorder %s22, 0
      %p262 = por %p260, %p261
      %p263 = scmp.ne.s32.totalorder %s249, %s250
      %p264 = scmp.eq.s32.totalorder %s23, 1
      %p265 = por %p263, %p264
      %p267 = scmp.ne.s32.totalorder %s250, %s266
      %p268 = scmp.eq.s32.totalorder %s23, 0
      %p269 = por %p267, %p268
      %s271 = sadd.s32 %s270, 1
      %p274 = scmp.eq.s32.totalorder %s17, 1
      %p275 = scmp.ne.s32.totalorder %s270, %s272
      %p276 = scmp.eq.s32.totalorder %s17, 0
      %p277 = por %p275, %p276
      %p278 = scmp.ne.s32.totalorder %s270, %s272
      %p279 = scmp.eq.s32.totalorder %s22, 1
      %p280 = por %p278, %p279
      %p281 = scmp.ne.s32.totalorder %s272, %s273
      %p282 = scmp.eq.s32.totalorder %s22, 0
      %p283 = por %p281, %p282
      %p284 = scmp.ne.s32.totalorder %s272, %s273
      %p285 = scmp.eq.s32.totalorder %s23, 1
      %p286 = por %p284, %p285
      %p288 = scmp.ne.s32.totalorder %s273, %s287
      %p289 = scmp.eq.s32.totalorder %s23, 0
      %p290 = por %p288, %p289
      %p291 = scmp.le.s32.totalorder 1, %s17
      %p292 = scmp.lt.s32.totalorder %s17, 3
      %p293 = pnand %p291, %p292
      %p294 = pneg %p293
      // Predicated region
      $region9: #{tpu_custom_call.1} parent=5 // pred_check
        _
      $region10: #{tpu_custom_call.1} parent=5 // pred_check_branch
        %296 = sbr.rel (%p293) target = $region12
      $region11: #{tpu_custom_call.1} parent=5 // pred_region
        %s297 = ssub.s32 %s17, 1
        // Predicated region
        $region13: #{tpu_custom_call.1} parent=11 // pred_check
          %p298 = pneg %p38
        $region14: #{tpu_custom_call.1} parent=11 // pred_check_branch
          %300 = sbr.rel (%p298) target = $region16
        $region15: #{tpu_custom_call.1} parent=11 // pred_region
          _
        $region16: #{tpu_custom_call.1} parent=11 // pred_fallthru
          _
        // Predicated region
        $region17: #{tpu_custom_call.1} parent=11 // pred_check
          %p301 = pneg %p59
        $region18: #{tpu_custom_call.1} parent=11 // pred_check_branch
          %303 = sbr.rel (%p301) target = $region20
        $region19: #{tpu_custom_call.1} parent=11 // pred_region
          _
        $region20: #{tpu_custom_call.1} parent=11 // pred_fallthru
          _
        // Predicated region
        $region21: #{tpu_custom_call.1} parent=11 // pred_check
          %p304 = pneg %p80
        $region22: #{tpu_custom_call.1} parent=11 // pred_check_branch
          %306 = sbr.rel (%p304) target = $region24
        $region23: #{tpu_custom_call.1} parent=11 // pred_region
          _
        $region24: #{tpu_custom_call.1} parent=11 // pred_fallthru
          _
      $region12: #{tpu_custom_call.1} parent=5 // pred_fallthru
        _
      %p307 = scmp.lt.s32.totalorder %s17, 2
      // Predicated region
      $region25: #{tpu_custom_call.1} parent=5 // pred_check
        %p308 = pneg %p307
      $region26: #{tpu_custom_call.1} parent=5 // pred_check_branch
        %310 = sbr.rel (%p308) target = $region28
      $region27: #{tpu_custom_call.1} parent=5 // pred_region
        // Predicated region
        $region29: #{tpu_custom_call.1} parent=27 // pred_check
          %p311 = pneg %p100
        $region30: #{tpu_custom_call.1} parent=27 // pred_check_branch
          %313 = sbr.rel (%p311) target = $region32
        $region31: #{tpu_custom_call.1} parent=27 // pred_region
          %p314 = scmp.lt.s32.totalorder %s17, 1
          %s315 = scalar_select %p314, %s17, 1
          %s316 = smul.addr %s315, 4
          %s317 = smul.addr %s316, 4
          %s318 = scalar_lea.vmem %s3, %s317
        $region32: #{tpu_custom_call.1} parent=27 // pred_fallthru
          _
        // Predicated region
        $region33: #{tpu_custom_call.1} parent=27 // pred_check
          %p319 = pneg %p126
        $region34: #{tpu_custom_call.1} parent=27 // pred_check_branch
          %321 = sbr.rel (%p319) target = $region36
        $region35: #{tpu_custom_call.1} parent=27 // pred_region
          %p322 = scmp.lt.s32.totalorder %s17, 1
          %s323 = scalar_select %p322, %s17, 1
          %s324 = scalar_lea.vmem %s4, %s323
        $region36: #{tpu_custom_call.1} parent=27 // pred_fallthru
          _
        // Predicated region
        $region37: #{tpu_custom_call.1} parent=27 // pred_check
          %p325 = pneg %p152
        $region38: #{tpu_custom_call.1} parent=27 // pred_check_branch
          %327 = sbr.rel (%p325) target = $region40
        $region39: #{tpu_custom_call.1} parent=27 // pred_region
          %p328 = scmp.lt.s32.totalorder %s17, 1
          %s329 = scalar_select %p328, %s17, 1
          %s330 = smul.addr %s329, 4
          %s331 = smul.addr %s330, 4
          %s332 = scalar_lea.vmem %s5, %s331
        $region40: #{tpu_custom_call.1} parent=27 // pred_fallthru
          _
        // Predicated region
        $region41: #{tpu_custom_call.1} parent=27 // pred_check
          %p333 = pneg %p178
        $region42: #{tpu_custom_call.1} parent=27 // pred_check_branch
          %335 = sbr.rel (%p333) target = $region44
        $region43: #{tpu_custom_call.1} parent=27 // pred_region
          %p336 = scmp.lt.s32.totalorder %s17, 1
          %s337 = scalar_select %p336, %s17, 1
          %s338 = smul.addr %s337, 4
          %s339 = smul.addr %s338, 4
          %s340 = scalar_lea.vmem %s6, %s339
        $region44: #{tpu_custom_call.1} parent=27 // pred_fallthru
          _
        // Predicated region
        $region45: #{tpu_custom_call.1} parent=27 // pred_check
          %p341 = pneg %p204
        $region46: #{tpu_custom_call.1} parent=27 // pred_check_branch
          %343 = sbr.rel (%p341) target = $region48
        $region47: #{tpu_custom_call.1} parent=27 // pred_region
          %p344 = scmp.lt.s32.totalorder %s17, 1
          %s345 = scalar_select %p344, %s17, 1
          %s346 = scalar_lea.vmem %s7, %s345
        $region48: #{tpu_custom_call.1} parent=27 // pred_fallthru
          _
        // Predicated region
        $region49: #{tpu_custom_call.1} parent=27 // pred_check
          %p347 = pneg %p230
        $region50: #{tpu_custom_call.1} parent=27 // pred_check_branch
          %349 = sbr.rel (%p347) target = $region52
        $region51: #{tpu_custom_call.1} parent=27 // pred_region
          %p350 = scmp.lt.s32.totalorder %s17, 1
          %s351 = scalar_select %p350, %s17, 1
          %s352 = smul.addr %s351, 16
          %s353 = smul.addr %s352, 4
          %s354 = scalar_lea.vmem %s8, %s353
        $region52: #{tpu_custom_call.1} parent=27 // pred_fallthru
          _
        // Predicated region
        $region53: #{tpu_custom_call.1} parent=27 // pred_check
          %p355 = pneg %p256
        $region54: #{tpu_custom_call.1} parent=27 // pred_check_branch
          %357 = sbr.rel (%p355) target = $region56
        $region55: #{tpu_custom_call.1} parent=27 // pred_region
          %p358 = scmp.lt.s32.totalorder %s17, 1
          %s359 = scalar_select %p358, %s17, 1
          %s360 = smul.addr %s359, 8
          %s361 = scalar_lea.vmem %s9, %s360
        $region56: #{tpu_custom_call.1} parent=27 // pred_fallthru
          _
      $region28: #{tpu_custom_call.1} parent=5 // pred_fallthru
        _
      %p362 = scmp.le.s32.totalorder 1, %s17
      %p363 = scmp.lt.s32.totalorder %s17, 3
      %p364 = pnand %p362, %p363
      %p365 = pneg %p364
      // Predicated region
      $region57: #{tpu_custom_call.1} parent=5 // pred_check
        _
      $region58: #{tpu_custom_call.1} parent=5 // pred_check_branch
        %367 = sbr.rel (%p364) target = $region60
      $region59: #{tpu_custom_call.1} parent=5 // pred_region
        %s368 = ssub.s32 %s17, 1
        %p369 = pneg %p38
        %p370 = pneg %p35
        %p371 = pneg %p59
        %p372 = pneg %p56
        %p373 = pneg %p80
        %p374 = pneg %p77
        %p375 = scmp.lt.s32.totalorder %s22, 1
        %s376 = scalar_select %p375, %s22, 1
        %s377 = smul.addr %s376, 4
        %s378 = smul.addr %s377, 4
        %s379 = scalar_lea.vmem %s3, %s378
        %p380 = pneg %p106
        %p381 = pneg %p103
        %p382 = scmp.lt.s32.totalorder %s22, 1
        %s383 = scalar_select %p382, %s22, 1
        %s384 = scalar_lea.vmem %s4, %s383
        %p385 = pneg %p132
        %p386 = pneg %p129
        %p387 = scmp.lt.s32.totalorder %s22, 1
        %s388 = scalar_select %p387, %s22, 1
        %s389 = smul.addr %s388, 4
        %s390 = smul.addr %s389, 4
        %s391 = scalar_lea.vmem %s5, %s390
        %p392 = pneg %p158
        %p393 = pneg %p155
        %p394 = scmp.lt.s32.totalorder %s22, 1
        %s395 = scalar_select %p394, %s22, 1
        %s396 = smul.addr %s395, 4
        %s397 = smul.addr %s396, 4
        %s398 = scalar_lea.vmem %s6, %s397
        %p399 = pneg %p184
        %p400 = pneg %p181
        %p401 = scmp.lt.s32.totalorder %s22, 1
        %s402 = scalar_select %p401, %s22, 1
        %s403 = scalar_lea.vmem %s7, %s402
        %p404 = pneg %p210
        %p405 = pneg %p207
        %p406 = scmp.lt.s32.totalorder %s22, 1
        %s407 = scalar_select %p406, %s22, 1
        %s408 = smul.addr %s407, 16
        %s409 = smul.addr %s408, 4
        %s410 = scalar_lea.vmem %s8, %s409
        %p411 = pneg %p236
        %p412 = pneg %p233
        %p413 = scmp.lt.s32.totalorder %s22, 1
        %s414 = scalar_select %p413, %s22, 1
        %s415 = smul.addr %s414, 8
        %s416 = scalar_lea.vmem %s9, %s415
        %p417 = pneg %p262
        %p418 = pneg %p259
        %p419 = pneg %p283
        %p420 = pneg %p280
        %p421 = scmp.lt.s32.totalorder %s22, 1
        %s422 = scalar_select %p421, %s22, 1
        %s423 = smul.addr %s422, 4
        %s424 = smul.addr %s423, 4
        %s425 = scalar_lea.vmem %s3, %s424
        %p426 = scmp.lt.s32.totalorder %s22, 1
        %s427 = scalar_select %p426, %s22, 1
        %s428 = scalar_lea.vmem %s4, %s427
        %p429 = scmp.lt.s32.totalorder %s22, 1
        %s430 = scalar_select %p429, %s22, 1
        %s431 = smul.addr %s430, 4
        %s432 = smul.addr %s431, 4
        %s433 = scalar_lea.vmem %s5, %s432
        %p434 = scmp.lt.s32.totalorder %s22, 1
        %s435 = scalar_select %p434, %s22, 1
        %s436 = smul.addr %s435, 4
        %s437 = smul.addr %s436, 4
        %s438 = scalar_lea.vmem %s6, %s437
        %p439 = scmp.lt.s32.totalorder %s22, 1
        %s440 = scalar_select %p439, %s22, 1
        %s441 = scalar_lea.vmem %s7, %s440
        %p442 = scmp.lt.s32.totalorder %s22, 1
        %s443 = scalar_select %p442, %s22, 1
        %s444 = smul.addr %s443, 16
        %s445 = smul.addr %s444, 4
        %s446 = scalar_lea.vmem %s8, %s445
        %p447 = scmp.lt.s32.totalorder %s22, 1
        %s448 = scalar_select %p447, %s22, 1
        %s449 = smul.addr %s448, 8
        %s450 = scalar_lea.vmem %s9, %s449
        %p452 = scmp.eq.s32.totalorder %s22, 0
        // Predicated region
        $region61: #{tpu_custom_call.1} parent=59 // pred_check
          %p453 = pneg %p452
        $region62: #{tpu_custom_call.1} parent=59 // pred_check_branch
          %455 = sbr.rel (%p453) target = $region64
        $region63: #{tpu_custom_call.1} parent=59 // pred_region
          %v456 = vld [vmem:[%s0] sm:$0xff]
          %v457 = vld [vmem:[%s0 + $0x8] sm:$0xff]
          %v458 = vld [vmem:[%s2] sm:$0x1]
          %v459 = vld [vmem:[%s2 + $0x1] sm:$0x1]
          %vm460 = vcmask 261120
          %v461 = vsel %vm460, %v456, 0.0
          %462 = vadd.xlane.f32.xlu0 %v461
          %v463 = vpop.xlane.xlu0 %462
          %v464 = vsel %vm460, %v457, 0.0
          %465 = vadd.xlane.f32.xlu0 %v464
          %v466 = vpop.xlane.xlu0 %465
          %v467 = vrcp.pop 32.0
          %v468 = vmul.f32 %v463, %v467
          %v469 = vmul.f32 %v466, %v467
          %v470 = vsub.f32 %v456, %v468
          %v471 = vsub.f32 %v457, %v469
          %v472 = vmul.f32 %v470, %v470
          %v473 = vmul.f32 %v471, %v471
          %v474 = vsel %vm460, %v472, 0.0
          %475 = vadd.xlane.f32.xlu0 %v474
          %v476 = vpop.xlane.xlu0 %475
          %v477 = vsel %vm460, %v473, 0.0
          %478 = vadd.xlane.f32.xlu0 %v477
          %v479 = vpop.xlane.xlu0 %478
          %v480 = vmul.f32 %v476, %v467
          %v481 = vmul.f32 %v479, %v467
          %v482 = vadd.f32 %v480, 1e-12
          %v483 = vadd.f32 %v481, 1e-12
          %v484 = vrsqrt.pop %v482
          %v485 = vrsqrt.pop %v483
          %v486 = vmul.f32 %v470, %v484
          %v487 = vmul.f32 %v471, %v485
          %v488 = vlaneseq
          %v489 = vshrl.u32 %v488, 7
          %v490 = vsub.s32 0, %v489
          %v491 = vrot.slane %v458, %v490
          %v492 = vmul.f32 %v486, %v491
          %v493 = vmul.f32 %v487, %v491
          %v494 = vlaneseq
          %v495 = vshrl.u32 %v494, 7
          %v496 = vsub.s32 0, %v495
          %v497 = vrot.slane %v459, %v496
          %v498 = vadd.f32 %v492, %v497
          %v499 = vadd.f32 %v493, %v497
          %500 = vst.msk [vmem:[#allocation2] sm:$0xff] %vm460, %v498
          %501 = vst.msk [vmem:[#allocation2 + $0x8] sm:$0xff] %vm460, %v499
        $region64: #{tpu_custom_call.1} parent=59 // pred_fallthru
          _
        %v502 = vld [vmem:[#allocation2] sm:$0xff]
        %v503 = vld [vmem:[#allocation2 + $0x8] sm:$0xff]
        %v504 = vld [vmem:[%s1] sm:$0x3]
        %v505 = vsub.f32 %v504, 1.0
        %v506 = vmul.f32 %v505, 1e+09
        %v509 = vunpack.c.l.s4 1966171168
        %v510 = vunpack.c.0.s8 %v509
        %v511 = vlaneseq
        %v512 = vshrl.u32 %v511, 7
        %v513 = vsub.s32 %v510, %v512
        %v514 = vrot.slane %v506, %v513
        %v515 = vcombine.high %v514, %v514
        %v517 = vunpack.c.l.s4 1966171168
        %v518 = vunpack.c.0.s8 %v517
        %v519 = vlaneseq
        %v520 = vshrl.u32 %v519, 7
        %v521 = vsub.s32 %v518, %v520
        %v522 = vrot.slane %v514, %v521
        %v524 = vunpack.c.l.s4 1966171168
        %v525 = vunpack.c.0.s8 %v524
        %v526 = vlaneseq
        %v527 = vshrl.u32 %v526, 7
        %v528 = vsub.s32 %v525, %v527
        %v529 = vrot.slane %v515, %v528
        %v530 = vpack.c.bf16 %v503, %v502
        %v531 = vld [vmem:[%s425] sm:$0xf]
        %v532 = vld [vmem:[%s425 + $0x4] sm:$0xf]
        %v533 = vld [vmem:[%s425 + $0x8] sm:$0xf]
        %v534 = vld [vmem:[%s425 + $0xc] sm:$0xf]
        %v535 = vld [vmem:[%s428] sm:$0x1]
        %v537 = vlaneseq
        %v538 = vshrl.u32 %v537, 7
        %v539 = vsub.s32 0, %v538
        %v540 = vrot.slane %v535, %v539
        %v546 = vunpack.c.l.b16 %v531
        %v547 = vunpack.c.l.b16 %v532
        %v548 = vunpack.c.l.b16 %v533
        %v549 = vunpack.c.l.b16 %v534
        %v550 = vpack.c.b16 %v547, %v546
        %v551 = vpack.c.b16 %v549, %v548
        %vm554 = vcmask 261120
        %v556 = vsel %vm554, %v530, 0
        %558 = vmatprep.subr.bf16.mxu0 0
        %559 = vmatpush1.bf16.msra.mxu0 %v550
        %560 = vmatprep.subr.bf16.mxu0 0
        %561 = vmatpush1.bf16.msra.mxu0 %v551
        %562 = vmatprep.subr.bf16.mxu0 0
        %563 = vmatpush1.bf16.msra.mxu0 0
        %564 = vmatprep.subr.bf16.mxu0 0
        %565 = vmatpush1.bf16.msra.mxu0 0
        %566 = vmatprep.subr.bf16.mxu0 0
        %567 = vmatpush1.bf16.msra.mxu0 0
        %568 = vmatprep.subr.bf16.mxu0 0
        %569 = vmatpush1.bf16.msra.mxu0 0
        %570 = vmatprep.subr.bf16.mxu0 0
        %571 = vmatpush1.bf16.msra.mxu0 0
        %572 = vmatprep.subr.bf16.mxu0 0
        %573 = vmatpush1.bf16.msra.mxu0 0
        %574 = vmatprep.subr.bf16.mxu0 0
        %575 = vmatpush1.bf16.msra.mxu0 0
        %576 = vmatprep.subr.bf16.mxu0 0
        %577 = vmatpush1.bf16.msra.mxu0 0
        %578 = vmatprep.subr.bf16.mxu0 0
        %579 = vmatpush1.bf16.msra.mxu0 0
        %580 = vmatprep.subr.bf16.mxu0 0
        %581 = vmatpush1.bf16.msra.mxu0 0
        %582 = vmatprep.subr.bf16.mxu0 0
        %583 = vmatpush1.bf16.msra.mxu0 0
        %584 = vmatprep.subr.bf16.mxu0 0
        %585 = vmatpush1.bf16.msra.mxu0 0
        %586 = vmatprep.subr.bf16.mxu0 0
        %587 = vmatpush1.bf16.msra.mxu0 0
        %588 = vmatprep.subr.bf16.mxu0 0
        %589 = vmatpush1.bf16.msra.mxu0 0
        %590 = vmatprep.mubr.bf16.mxu0 0
        %591 = vmatmul.mubr.bf16.gmra.mrb[0].mxu0 %v556
        %v592 = vpop.f32.mrb[0].mxu0
        %v593 = vadd.f32 %v540, %v592
        %v594 = vpop.f32.mrb[0].mxu0
        %v595 = vpop.f32.mrb[0].mxu0
        %v596 = vadd.f32 %v540, %v595
        %v597 = vpop.f32.mrb[0].mxu0
        %598 = vdwg.mxu0
        %600 = vrot.lane.b32.xlu0 %v593, 96
        %v601 = vpop.permute.xlu0 %600
        %vm602 = vcmask 64512
        %v603 = vsel %vm602, %v593, 0
        %v605 = vsel %vm602, %v601, 0
        %607 = vmatprep.subr.mxu0 0.0
        %608 = vmatpush1.xpose.msra.mxu0 %v605
        %609 = vmatprep.subr.mxu0 0.0
        %610 = vmatpush1.xpose.msra.mxu0 0.0
        %611 = vmatprep.subr.mxu0 0.0
        %612 = vmatpush1.xpose.msra.mxu0 0.0
        %613 = vmatprep.subr.mxu0 0.0
        %614 = vmatpush1.xpose.msra.mxu0 0.0
        %615 = vmatprep.subr.mxu0 0.0
        %616 = vmatpush1.xpose.msra.mxu0 0.0
        %617 = vmatprep.subr.mxu0 0.0
        %618 = vmatpush1.xpose.msra.mxu0 0.0
        %619 = vmatprep.subr.mxu0 0.0
        %620 = vmatpush1.xpose.msra.mxu0 0.0
        %621 = vmatprep.subr.mxu0 0.0
        %622 = vmatpush1.xpose.msra.mxu0 0.0
        %623 = vmatprep.subr.mxu0 0.0
        %624 = vmatpush1.xpose.msra.mxu0 0.0
        %625 = vmatprep.subr.mxu0 0.0
        %626 = vmatpush1.xpose.msra.mxu0 0.0
        %627 = vmatprep.subr.mxu0 0.0
        %628 = vmatpush1.xpose.msra.mxu0 0.0
        %629 = vmatprep.subr.mxu0 0.0
        %630 = vmatpush1.xpose.msra.mxu0 0.0
        %631 = vmatprep.subr.mxu0 0.0
        %632 = vmatpush1.xpose.msra.mxu0 0.0
        %633 = vmatprep.subr.mxu0 0.0
        %634 = vmatpush1.xpose.msra.mxu0 0.0
        %635 = vmatprep.subr.mxu0 0.0
        %636 = vmatpush1.xpose.msra.mxu0 0.0
        %637 = vmatprep.subr.mxu0 0.0
        %638 = vmatpush1.xpose.msra.mxu0 0.0
        %639 = vmatprep.subr.mxu0 0.0
        %640 = vmatpush1.xpose.msra.mxu0 0.0
        %641 = vmatprep.subr.mxu0 0.0
        %642 = vmatpush1.xpose.msra.mxu0 0.0
        %643 = vmatprep.subr.mxu0 0.0
        %644 = vmatpush1.xpose.msra.mxu0 0.0
        %645 = vmatprep.subr.mxu0 0.0
        %646 = vmatpush1.xpose.msra.mxu0 0.0
        %647 = vmatprep.subr.mxu0 0.0
        %648 = vmatpush1.xpose.msra.mxu0 0.0
        %649 = vmatprep.subr.mxu0 0.0
        %650 = vmatpush1.xpose.msra.mxu0 0.0
        %651 = vmatprep.subr.mxu0 0.0
        %652 = vmatpush1.xpose.msra.mxu0 0.0
        %653 = vmatprep.subr.mxu0 0.0
        %654 = vmatpush1.xpose.msra.mxu0 0.0
        %655 = vmatprep.subr.mxu0 0.0
        %656 = vmatpush1.xpose.msra.mxu0 0.0
        %657 = vmatprep.subr.mxu0 0.0
        %658 = vmatpush1.xpose.msra.mxu0 0.0
        %659 = vmatprep.subr.mxu0 0.0
        %660 = vmatpush1.xpose.msra.mxu0 0.0
        %661 = vmatprep.subr.mxu0 0.0
        %662 = vmatpush1.xpose.msra.mxu0 0.0
        %663 = vmatprep.subr.mxu0 0.0
        %664 = vmatpush1.xpose.msra.mxu0 0.0
        %665 = vmatprep.subr.mxu0 0.0
        %666 = vmatpush1.xpose.msra.mxu0 0.0
        %667 = vmatprep.subr.mxu0 0.0
        %668 = vmatpush1.xpose.msra.mxu0 0.0
        %669 = vmatprep.subr.mxu0 0.0
        %670 = vmatpush1.xpose.msra.mxu0 0.0
        %671 = vmatprep.mubr.f32.mxu0 0.0
        %672 = vmatmul.mubr.f32.gmra.mrb[0].mxu0 %v603
        %v673 = vpop.f32.mrb[0].mxu0
        %v674 = vadd.f32 0.0, %v673
        %v675 = vpop.f32.mrb[0].mxu0
        %676 = vdwg.mxu0
        %678 = vrot.lane.b32.xlu0 %v596, 96
        %v679 = vpop.permute.xlu0 %678
        %v680 = vsel %vm602, %v596, 0
        %v682 = vsel %vm602, %v679, 0
        %684 = vmatprep.subr.mxu0 0.0
        %685 = vmatpush1.xpose.msra.mxu0 %v682
        %686 = vmatprep.subr.mxu0 0.0
        %687 = vmatpush1.xpose.msra.mxu0 0.0
        %688 = vmatprep.subr.mxu0 0.0
        %689 = vmatpush1.xpose.msra.mxu0 0.0
        %690 = vmatprep.subr.mxu0 0.0
        %691 = vmatpush1.xpose.msra.mxu0 0.0
        %692 = vmatprep.subr.mxu0 0.0
        %693 = vmatpush1.xpose.msra.mxu0 0.0
        %694 = vmatprep.subr.mxu0 0.0
        %695 = vmatpush1.xpose.msra.mxu0 0.0
        %696 = vmatprep.subr.mxu0 0.0
        %697 = vmatpush1.xpose.msra.mxu0 0.0
        %698 = vmatprep.subr.mxu0 0.0
        %699 = vmatpush1.xpose.msra.mxu0 0.0
        %700 = vmatprep.subr.mxu0 0.0
        %701 = vmatpush1.xpose.msra.mxu0 0.0
        %702 = vmatprep.subr.mxu0 0.0
        %703 = vmatpush1.xpose.msra.mxu0 0.0
        %704 = vmatprep.subr.mxu0 0.0
        %705 = vmatpush1.xpose.msra.mxu0 0.0
        %706 = vmatprep.subr.mxu0 0.0
        %707 = vmatpush1.xpose.msra.mxu0 0.0
        %708 = vmatprep.subr.mxu0 0.0
        %709 = vmatpush1.xpose.msra.mxu0 0.0
        %710 = vmatprep.subr.mxu0 0.0
        %711 = vmatpush1.xpose.msra.mxu0 0.0
        %712 = vmatprep.subr.mxu0 0.0
        %713 = vmatpush1.xpose.msra.mxu0 0.0
        %714 = vmatprep.subr.mxu0 0.0
        %715 = vmatpush1.xpose.msra.mxu0 0.0
        %716 = vmatprep.subr.mxu0 0.0
        %717 = vmatpush1.xpose.msra.mxu0 0.0
        %718 = vmatprep.subr.mxu0 0.0
        %719 = vmatpush1.xpose.msra.mxu0 0.0
        %720 = vmatprep.subr.mxu0 0.0
        %721 = vmatpush1.xpose.msra.mxu0 0.0
        %722 = vmatprep.subr.mxu0 0.0
        %723 = vmatpush1.xpose.msra.mxu0 0.0
        %724 = vmatprep.subr.mxu0 0.0
        %725 = vmatpush1.xpose.msra.mxu0 0.0
        %726 = vmatprep.subr.mxu0 0.0
        %727 = vmatpush1.xpose.msra.mxu0 0.0
        %728 = vmatprep.subr.mxu0 0.0
        %729 = vmatpush1.xpose.msra.mxu0 0.0
        %730 = vmatprep.subr.mxu0 0.0
        %731 = vmatpush1.xpose.msra.mxu0 0.0
        %732 = vmatprep.subr.mxu0 0.0
        %733 = vmatpush1.xpose.msra.mxu0 0.0
        %734 = vmatprep.subr.mxu0 0.0
        %735 = vmatpush1.xpose.msra.mxu0 0.0
        %736 = vmatprep.subr.mxu0 0.0
        %737 = vmatpush1.xpose.msra.mxu0 0.0
        %738 = vmatprep.subr.mxu0 0.0
        %739 = vmatpush1.xpose.msra.mxu0 0.0
        %740 = vmatprep.subr.mxu0 0.0
        %741 = vmatpush1.xpose.msra.mxu0 0.0
        %742 = vmatprep.subr.mxu0 0.0
        %743 = vmatpush1.xpose.msra.mxu0 0.0
        %744 = vmatprep.subr.mxu0 0.0
        %745 = vmatpush1.xpose.msra.mxu0 0.0
        %746 = vmatprep.subr.mxu0 0.0
        %747 = vmatpush1.xpose.msra.mxu0 0.0
        %748 = vmatprep.mubr.f32.mxu0 0.0
        %749 = vmatmul.mubr.f32.gmra.mrb[0].mxu0 %v680
        %v750 = vpop.f32.mrb[0].mxu0
        %v751 = vadd.f32 0.0, %v750
        %v752 = vpop.f32.mrb[0].mxu0
        %753 = vdwg.mxu0
        %v754 = vmul.f32 %v674, 0.35355338
        %v755 = vmul.f32 %v751, 0.35355338
        %v756 = vlaneseq
        %v757 = vshrl.u32 %v756, 7
        %v758 = vsub.s32 0, %v757
        %v759 = vrot.slane %v522, %v758
        %v760 = vlaneseq
        %v761 = vshrl.u32 %v760, 7
        %v762 = vsub.s32 0, %v761
        %v763 = vrot.slane %v529, %v762
        %v766 = vadd.f32 %v754, %v759
        %v767 = vadd.f32 %v755, %v763
        %v768 = vsel %vm602, %v766, -inf
        %769 = vmax.xlane.f32.xlu0 %v768
        %v770 = vpop.xlane.xlu0 %769
        %v771 = vsel %vm602, %v767, -inf
        %772 = vmax.xlane.f32.xlu0 %v771
        %v773 = vpop.xlane.xlu0 %772
        %v774 = vsub.f32 %v766, %v770
        %v775 = vsub.f32 %v767, %v773
        %v776 = vmul.f32 %v774, 1.442695
        %v777 = vpow.pop %v776
        %v778 = vmul.f32 %v775, 1.442695
        %v779 = vpow.pop %v778
        %v780 = vsel %vm602, %v777, 0.0
        %781 = vadd.xlane.f32.xlu0 %v780
        %v782 = vpop.xlane.xlu0 %781
        %v783 = vsel %vm602, %v779, 0.0
        %784 = vadd.xlane.f32.xlu0 %v783
        %v785 = vpop.xlane.xlu0 %784
        %v786 = vrcp.pop %v782
        %v787 = vrcp.pop %v785
        %v788 = vmul.f32 %v777, %v786
        %v789 = vmul.f32 %v779, %v787
        %790 = vrot.lane.b32.xlu0 %v593, 64
        %v791 = vpop.permute.xlu0 %790
        %v794 = vsel %vm602, %v788, 0
        %796 = vmatprep.subr.mxu0 0.0
        %797 = vmatpush1.msra.mxu0 %v791
        %798 = vmatprep.subr.mxu0 0.0
        %799 = vmatpush1.msra.mxu0 0.0
        %800 = vmatprep.subr.mxu0 0.0
        %801 = vmatpush1.msra.mxu0 0.0
        %802 = vmatprep.subr.mxu0 0.0
        %803 = vmatpush1.msra.mxu0 0.0
        %804 = vmatprep.subr.mxu0 0.0
        %805 = vmatpush1.msra.mxu0 0.0
        %806 = vmatprep.subr.mxu0 0.0
        %807 = vmatpush1.msra.mxu0 0.0
        %808 = vmatprep.subr.mxu0 0.0
        %809 = vmatpush1.msra.mxu0 0.0
        %810 = vmatprep.subr.mxu0 0.0
        %811 = vmatpush1.msra.mxu0 0.0
        %812 = vmatprep.subr.mxu0 0.0
        %813 = vmatpush1.msra.mxu0 0.0
        %814 = vmatprep.subr.mxu0 0.0
        %815 = vmatpush1.msra.mxu0 0.0
        %816 = vmatprep.subr.mxu0 0.0
        %817 = vmatpush1.msra.mxu0 0.0
        %818 = vmatprep.subr.mxu0 0.0
        %819 = vmatpush1.msra.mxu0 0.0
        %820 = vmatprep.subr.mxu0 0.0
        %821 = vmatpush1.msra.mxu0 0.0
        %822 = vmatprep.subr.mxu0 0.0
        %823 = vmatpush1.msra.mxu0 0.0
        %824 = vmatprep.subr.mxu0 0.0
        %825 = vmatpush1.msra.mxu0 0.0
        %826 = vmatprep.subr.mxu0 0.0
        %827 = vmatpush1.msra.mxu0 0.0
        %828 = vmatprep.subr.mxu0 0.0
        %829 = vmatpush1.msra.mxu0 0.0
        %830 = vmatprep.subr.mxu0 0.0
        %831 = vmatpush1.msra.mxu0 0.0
        %832 = vmatprep.subr.mxu0 0.0
        %833 = vmatpush1.msra.mxu0 0.0
        %834 = vmatprep.subr.mxu0 0.0
        %835 = vmatpush1.msra.mxu0 0.0
        %836 = vmatprep.subr.mxu0 0.0
        %837 = vmatpush1.msra.mxu0 0.0
        %838 = vmatprep.subr.mxu0 0.0
        %839 = vmatpush1.msra.mxu0 0.0
        %840 = vmatprep.subr.mxu0 0.0
        %841 = vmatpush1.msra.mxu0 0.0
        %842 = vmatprep.subr.mxu0 0.0
        %843 = vmatpush1.msra.mxu0 0.0
        %844 = vmatprep.subr.mxu0 0.0
        %845 = vmatpush1.msra.mxu0 0.0
        %846 = vmatprep.subr.mxu0 0.0
        %847 = vmatpush1.msra.mxu0 0.0
        %848 = vmatprep.subr.mxu0 0.0
        %849 = vmatpush1.msra.mxu0 0.0
        %850 = vmatprep.subr.mxu0 0.0
        %851 = vmatpush1.msra.mxu0 0.0
        %852 = vmatprep.subr.mxu0 0.0
        %853 = vmatpush1.msra.mxu0 0.0
        %854 = vmatprep.subr.mxu0 0.0
        %855 = vmatpush1.msra.mxu0 0.0
        %856 = vmatprep.subr.mxu0 0.0
        %857 = vmatpush1.msra.mxu0 0.0
        %858 = vmatprep.subr.mxu0 0.0
        %859 = vmatpush1.msra.mxu0 0.0
        %860 = vmatprep.mubr.f32.mxu0 0.0
        %861 = vmatmul.mubr.f32.gmra.mrb[0].mxu0 %v794
        %v862 = vpop.f32.mrb[0].mxu0
        %v863 = vadd.f32 0.0, %v862
        %v864 = vpop.f32.mrb[0].mxu0
        %865 = vdwg.mxu0
        %866 = vrot.lane.b32.xlu0 %v596, 64
        %v867 = vpop.permute.xlu0 %866
        %v870 = vsel %vm602, %v789, 0
        %872 = vmatprep.subr.mxu0 0.0
        %873 = vmatpush1.msra.mxu0 %v867
        %874 = vmatprep.subr.mxu0 0.0
        %875 = vmatpush1.msra.mxu0 0.0
        %876 = vmatprep.subr.mxu0 0.0
        %877 = vmatpush1.msra.mxu0 0.0
        %878 = vmatprep.subr.mxu0 0.0
        %879 = vmatpush1.msra.mxu0 0.0
        %880 = vmatprep.subr.mxu0 0.0
        %881 = vmatpush1.msra.mxu0 0.0
        %882 = vmatprep.subr.mxu0 0.0
        %883 = vmatpush1.msra.mxu0 0.0
        %884 = vmatprep.subr.mxu0 0.0
        %885 = vmatpush1.msra.mxu0 0.0
        %886 = vmatprep.subr.mxu0 0.0
        %887 = vmatpush1.msra.mxu0 0.0
        %888 = vmatprep.subr.mxu0 0.0
        %889 = vmatpush1.msra.mxu0 0.0
        %890 = vmatprep.subr.mxu0 0.0
        %891 = vmatpush1.msra.mxu0 0.0
        %892 = vmatprep.subr.mxu0 0.0
        %893 = vmatpush1.msra.mxu0 0.0
        %894 = vmatprep.subr.mxu0 0.0
        %895 = vmatpush1.msra.mxu0 0.0
        %896 = vmatprep.subr.mxu0 0.0
        %897 = vmatpush1.msra.mxu0 0.0
        %898 = vmatprep.subr.mxu0 0.0
        %899 = vmatpush1.msra.mxu0 0.0
        %900 = vmatprep.subr.mxu0 0.0
        %901 = vmatpush1.msra.mxu0 0.0
        %902 = vmatprep.subr.mxu0 0.0
        %903 = vmatpush1.msra.mxu0 0.0
        %904 = vmatprep.subr.mxu0 0.0
        %905 = vmatpush1.msra.mxu0 0.0
        %906 = vmatprep.subr.mxu0 0.0
        %907 = vmatpush1.msra.mxu0 0.0
        %908 = vmatprep.subr.mxu0 0.0
        %909 = vmatpush1.msra.mxu0 0.0
        %910 = vmatprep.subr.mxu0 0.0
        %911 = vmatpush1.msra.mxu0 0.0
        %912 = vmatprep.subr.mxu0 0.0
        %913 = vmatpush1.msra.mxu0 0.0
        %914 = vmatprep.subr.mxu0 0.0
        %915 = vmatpush1.msra.mxu0 0.0
        %916 = vmatprep.subr.mxu0 0.0
        %917 = vmatpush1.msra.mxu0 0.0
        %918 = vmatprep.subr.mxu0 0.0
        %919 = vmatpush1.msra.mxu0 0.0
        %920 = vmatprep.subr.mxu0 0.0
        %921 = vmatpush1.msra.mxu0 0.0
        %922 = vmatprep.subr.mxu0 0.0
        %923 = vmatpush1.msra.mxu0 0.0
        %924 = vmatprep.subr.mxu0 0.0
        %925 = vmatpush1.msra.mxu0 0.0
        %926 = vmatprep.subr.mxu0 0.0
        %927 = vmatpush1.msra.mxu0 0.0
        %928 = vmatprep.subr.mxu0 0.0
        %929 = vmatpush1.msra.mxu0 0.0
        %930 = vmatprep.subr.mxu0 0.0
        %931 = vmatpush1.msra.mxu0 0.0
        %932 = vmatprep.subr.mxu0 0.0
        %933 = vmatpush1.msra.mxu0 0.0
        %934 = vmatprep.subr.mxu0 0.0
        %935 = vmatpush1.msra.mxu0 0.0
        %936 = vmatprep.mubr.f32.mxu0 0.0
        %937 = vmatmul.mubr.f32.gmra.mrb[0].mxu0 %v870
        %v938 = vpop.f32.mrb[0].mxu0
        %v939 = vadd.f32 0.0, %v938
        %v940 = vpop.f32.mrb[0].mxu0
        %941 = vdwg.mxu0
        %942 = vrot.lane.b32.xlu0 %v593, 120
        %v943 = vpop.permute.xlu0 %942
        %944 = vrot.lane.b32.xlu0 %v593, 88
        %v945 = vpop.permute.xlu0 %944
        %v946 = vsel %vm602, %v943, 0
        %v948 = vsel %vm602, %v945, 0
        %950 = vmatprep.subr.mxu0 0.0
        %951 = vmatpush1.xpose.msra.mxu0 %v948
        %952 = vmatprep.subr.mxu0 0.0
        %953 = vmatpush1.xpose.msra.mxu0 0.0
        %954 = vmatprep.subr.mxu0 0.0
        %955 = vmatpush1.xpose.msra.mxu0 0.0
        %956 = vmatprep.subr.mxu0 0.0
        %957 = vmatpush1.xpose.msra.mxu0 0.0
        %958 = vmatprep.subr.mxu0 0.0
        %959 = vmatpush1.xpose.msra.mxu0 0.0
        %960 = vmatprep.subr.mxu0 0.0
        %961 = vmatpush1.xpose.msra.mxu0 0.0
        %962 = vmatprep.subr.mxu0 0.0
        %963 = vmatpush1.xpose.msra.mxu0 0.0
        %964 = vmatprep.subr.mxu0 0.0
        %965 = vmatpush1.xpose.msra.mxu0 0.0
        %966 = vmatprep.subr.mxu0 0.0
        %967 = vmatpush1.xpose.msra.mxu0 0.0
        %968 = vmatprep.subr.mxu0 0.0
        %969 = vmatpush1.xpose.msra.mxu0 0.0
        %970 = vmatprep.subr.mxu0 0.0
        %971 = vmatpush1.xpose.msra.mxu0 0.0
        %972 = vmatprep.subr.mxu0 0.0
        %973 = vmatpush1.xpose.msra.mxu0 0.0
        %974 = vmatprep.subr.mxu0 0.0
        %975 = vmatpush1.xpose.msra.mxu0 0.0
        %976 = vmatprep.subr.mxu0 0.0
        %977 = vmatpush1.xpose.msra.mxu0 0.0
        %978 = vmatprep.subr.mxu0 0.0
        %979 = vmatpush1.xpose.msra.mxu0 0.0
        %980 = vmatprep.subr.mxu0 0.0
        %981 = vmatpush1.xpose.msra.mxu0 0.0
        %982 = vmatprep.subr.mxu0 0.0
        %983 = vmatpush1.xpose.msra.mxu0 0.0
        %984 = vmatprep.subr.mxu0 0.0
        %985 = vmatpush1.xpose.msra.mxu0 0.0
        %986 = vmatprep.subr.mxu0 0.0
        %987 = vmatpush1.xpose.msra.mxu0 0.0
        %988 = vmatprep.subr.mxu0 0.0
        %989 = vmatpush1.xpose.msra.mxu0 0.0
        %990 = vmatprep.subr.mxu0 0.0
        %991 = vmatpush1.xpose.msra.mxu0 0.0
        %992 = vmatprep.subr.mxu0 0.0
        %993 = vmatpush1.xpose.msra.mxu0 0.0
        %994 = vmatprep.subr.mxu0 0.0
        %995 = vmatpush1.xpose.msra.mxu0 0.0
        %996 = vmatprep.subr.mxu0 0.0
        %997 = vmatpush1.xpose.msra.mxu0 0.0
        %998 = vmatprep.subr.mxu0 0.0
        %999 = vmatpush1.xpose.msra.mxu0 0.0
        %1000 = vmatprep.subr.mxu0 0.0
        %1001 = vmatpush1.xpose.msra.mxu0 0.0
        %1002 = vmatprep.subr.mxu0 0.0
        %1003 = vmatpush1.xpose.msra.mxu0 0.0
        %1004 = vmatprep.subr.mxu0 0.0
        %1005 = vmatpush1.xpose.msra.mxu0 0.0
        %1006 = vmatprep.subr.mxu0 0.0
        %1007 = vmatpush1.xpose.msra.mxu0 0.0
        %1008 = vmatprep.subr.mxu0 0.0
        %1009 = vmatpush1.xpose.msra.mxu0 0.0
        %1010 = vmatprep.subr.mxu0 0.0
        %1011 = vmatpush1.xpose.msra.mxu0 0.0
        %1012 = vmatprep.subr.mxu0 0.0
        %1013 = vmatpush1.xpose.msra.mxu0 0.0
        %1014 = vmatprep.mubr.f32.mxu0 0.0
        %1015 = vmatmul.mubr.f32.gmra.mrb[0].mxu0 %v946
        %v1016 = vpop.f32.mrb[0].mxu0
        %v1017 = vadd.f32 0.0, %v1016
        %v1018 = vpop.f32.mrb[0].mxu0
        %1019 = vdwg.mxu0
        %1020 = vrot.lane.b32.xlu0 %v596, 120
        %v1021 = vpop.permute.xlu0 %1020
        %1022 = vrot.lane.b32.xlu0 %v596, 88
        %v1023 = vpop.permute.xlu0 %1022
        %v1024 = vsel %vm602, %v1021, 0
        %v1026 = vsel %vm602, %v1023, 0
        %1028 = vmatprep.subr.mxu0 0.0
        %1029 = vmatpush1.xpose.msra.mxu0 %v1026
        %1030 = vmatprep.subr.mxu0 0.0
        %1031 = vmatpush1.xpose.msra.mxu0 0.0
        %1032 = vmatprep.subr.mxu0 0.0
        %1033 = vmatpush1.xpose.msra.mxu0 0.0
        %1034 = vmatprep.subr.mxu0 0.0
        %1035 = vmatpush1.xpose.msra.mxu0 0.0
        %1036 = vmatprep.subr.mxu0 0.0
        %1037 = vmatpush1.xpose.msra.mxu0 0.0
        %1038 = vmatprep.subr.mxu0 0.0
        %1039 = vmatpush1.xpose.msra.mxu0 0.0
        %1040 = vmatprep.subr.mxu0 0.0
        %1041 = vmatpush1.xpose.msra.mxu0 0.0
        %1042 = vmatprep.subr.mxu0 0.0
        %1043 = vmatpush1.xpose.msra.mxu0 0.0
        %1044 = vmatprep.subr.mxu0 0.0
        %1045 = vmatpush1.xpose.msra.mxu0 0.0
        %1046 = vmatprep.subr.mxu0 0.0
        %1047 = vmatpush1.xpose.msra.mxu0 0.0
        %1048 = vmatprep.subr.mxu0 0.0
        %1049 = vmatpush1.xpose.msra.mxu0 0.0
        %1050 = vmatprep.subr.mxu0 0.0
        %1051 = vmatpush1.xpose.msra.mxu0 0.0
        %1052 = vmatprep.subr.mxu0 0.0
        %1053 = vmatpush1.xpose.msra.mxu0 0.0
        %1054 = vmatprep.subr.mxu0 0.0
        %1055 = vmatpush1.xpose.msra.mxu0 0.0
        %1056 = vmatprep.subr.mxu0 0.0
        %1057 = vmatpush1.xpose.msra.mxu0 0.0
        %1058 = vmatprep.subr.mxu0 0.0
        %1059 = vmatpush1.xpose.msra.mxu0 0.0
        %1060 = vmatprep.subr.mxu0 0.0
        %1061 = vmatpush1.xpose.msra.mxu0 0.0
        %1062 = vmatprep.subr.mxu0 0.0
        %1063 = vmatpush1.xpose.msra.mxu0 0.0
        %1064 = vmatprep.subr.mxu0 0.0
        %1065 = vmatpush1.xpose.msra.mxu0 0.0
        %1066 = vmatprep.subr.mxu0 0.0
        %1067 = vmatpush1.xpose.msra.mxu0 0.0
        %1068 = vmatprep.subr.mxu0 0.0
        %1069 = vmatpush1.xpose.msra.mxu0 0.0
        %1070 = vmatprep.subr.mxu0 0.0
        %1071 = vmatpush1.xpose.msra.mxu0 0.0
        %1072 = vmatprep.subr.mxu0 0.0
        %1073 = vmatpush1.xpose.msra.mxu0 0.0
        %1074 = vmatprep.subr.mxu0 0.0
        %1075 = vmatpush1.xpose.msra.mxu0 0.0
        %1076 = vmatprep.subr.mxu0 0.0
        %1077 = vmatpush1.xpose.msra.mxu0 0.0
        %1078 = vmatprep.subr.mxu0 0.0
        %1079 = vmatpush1.xpose.msra.mxu0 0.0
        %1080 = vmatprep.subr.mxu0 0.0
        %1081 = vmatpush1.xpose.msra.mxu0 0.0
        %1082 = vmatprep.subr.mxu0 0.0
        %1083 = vmatpush1.xpose.msra.mxu0 0.0
        %1084 = vmatprep.subr.mxu0 0.0
        %1085 = vmatpush1.xpose.msra.mxu0 0.0
        %1086 = vmatprep.subr.mxu0 0.0
        %1087 = vmatpush1.xpose.msra.mxu0 0.0
        %1088 = vmatprep.subr.mxu0 0.0
        %1089 = vmatpush1.xpose.msra.mxu0 0.0
        %1090 = vmatprep.subr.mxu0 0.0
        %1091 = vmatpush1.xpose.msra.mxu0 0.0
        %1092 = vmatprep.mubr.f32.mxu0 0.0
        %1093 = vmatmul.mubr.f32.gmra.mrb[0].mxu0 %v1024
        %v1094 = vpop.f32.mrb[0].mxu0
        %v1095 = vadd.f32 0.0, %v1094
        %v1096 = vpop.f32.mrb[0].mxu0
        %1097 = vdwg.mxu0
        %v1098 = vmul.f32 %v1017, 0.35355338
        %v1099 = vmul.f32 %v1095, 0.35355338
        %v1100 = vadd.f32 %v1098, %v759
        %v1101 = vadd.f32 %v1099, %v763
        %v1102 = vsel %vm602, %v1100, -inf
        %1103 = vmax.xlane.f32.xlu0 %v1102
        %v1104 = vpop.xlane.xlu0 %1103
        %v1105 = vsel %vm602, %v1101, -inf
        %1106 = vmax.xlane.f32.xlu0 %v1105
        %v1107 = vpop.xlane.xlu0 %1106
        %v1108 = vsub.f32 %v1100, %v1104
        %v1109 = vsub.f32 %v1101, %v1107
        %v1110 = vmul.f32 %v1108, 1.442695
        %v1111 = vpow.pop %v1110
        %v1112 = vmul.f32 %v1109, 1.442695
        %v1113 = vpow.pop %v1112
        %v1114 = vsel %vm602, %v1111, 0.0
        %1115 = vadd.xlane.f32.xlu0 %v1114
        %v1116 = vpop.xlane.xlu0 %1115
        %v1117 = vsel %vm602, %v1113, 0.0
        %1118 = vadd.xlane.f32.xlu0 %v1117
        %v1119 = vpop.xlane.xlu0 %1118
        %v1120 = vrcp.pop %v1116
        %v1121 = vrcp.pop %v1119
        %v1122 = vmul.f32 %v1111, %v1120
        %v1123 = vmul.f32 %v1113, %v1121
        %1124 = vrot.lane.b32.xlu0 %v593, 56
        %v1125 = vpop.permute.xlu0 %1124
        %v1128 = vsel %vm602, %v1122, 0
        %1130 = vmatprep.subr.mxu0 0.0
        %1131 = vmatpush1.msra.mxu0 %v1125
        %1132 = vmatprep.subr.mxu0 0.0
        %1133 = vmatpush1.msra.mxu0 0.0
        %1134 = vmatprep.subr.mxu0 0.0
        %1135 = vmatpush1.msra.mxu0 0.0
        %1136 = vmatprep.subr.mxu0 0.0
        %1137 = vmatpush1.msra.mxu0 0.0
        %1138 = vmatprep.subr.mxu0 0.0
        %1139 = vmatpush1.msra.mxu0 0.0
        %1140 = vmatprep.subr.mxu0 0.0
        %1141 = vmatpush1.msra.mxu0 0.0
        %1142 = vmatprep.subr.mxu0 0.0
        %1143 = vmatpush1.msra.mxu0 0.0
        %1144 = vmatprep.subr.mxu0 0.0
        %1145 = vmatpush1.msra.mxu0 0.0
        %1146 = vmatprep.subr.mxu0 0.0
        %1147 = vmatpush1.msra.mxu0 0.0
        %1148 = vmatprep.subr.mxu0 0.0
        %1149 = vmatpush1.msra.mxu0 0.0
        %1150 = vmatprep.subr.mxu0 0.0
        %1151 = vmatpush1.msra.mxu0 0.0
        %1152 = vmatprep.subr.mxu0 0.0
        %1153 = vmatpush1.msra.mxu0 0.0
        %1154 = vmatprep.subr.mxu0 0.0
        %1155 = vmatpush1.msra.mxu0 0.0
        %1156 = vmatprep.subr.mxu0 0.0
        %1157 = vmatpush1.msra.mxu0 0.0
        %1158 = vmatprep.subr.mxu0 0.0
        %1159 = vmatpush1.msra.mxu0 0.0
        %1160 = vmatprep.subr.mxu0 0.0
        %1161 = vmatpush1.msra.mxu0 0.0
        %1162 = vmatprep.subr.mxu0 0.0
        %1163 = vmatpush1.msra.mxu0 0.0
        %1164 = vmatprep.subr.mxu0 0.0
        %1165 = vmatpush1.msra.mxu0 0.0
        %1166 = vmatprep.subr.mxu0 0.0
        %1167 = vmatpush1.msra.mxu0 0.0
        %1168 = vmatprep.subr.mxu0 0.0
        %1169 = vmatpush1.msra.mxu0 0.0
        %1170 = vmatprep.subr.mxu0 0.0
        %1171 = vmatpush1.msra.mxu0 0.0
        %1172 = vmatprep.subr.mxu0 0.0
        %1173 = vmatpush1.msra.mxu0 0.0
        %1174 = vmatprep.subr.mxu0 0.0
        %1175 = vmatpush1.msra.mxu0 0.0
        %1176 = vmatprep.subr.mxu0 0.0
        %1177 = vmatpush1.msra.mxu0 0.0
        %1178 = vmatprep.subr.mxu0 0.0
        %1179 = vmatpush1.msra.mxu0 0.0
        %1180 = vmatprep.subr.mxu0 0.0
        %1181 = vmatpush1.msra.mxu0 0.0
        %1182 = vmatprep.subr.mxu0 0.0
        %1183 = vmatpush1.msra.mxu0 0.0
        %1184 = vmatprep.subr.mxu0 0.0
        %1185 = vmatpush1.msra.mxu0 0.0
        %1186 = vmatprep.subr.mxu0 0.0
        %1187 = vmatpush1.msra.mxu0 0.0
        %1188 = vmatprep.subr.mxu0 0.0
        %1189 = vmatpush1.msra.mxu0 0.0
        %1190 = vmatprep.subr.mxu0 0.0
        %1191 = vmatpush1.msra.mxu0 0.0
        %1192 = vmatprep.subr.mxu0 0.0
        %1193 = vmatpush1.msra.mxu0 0.0
        %1194 = vmatprep.mubr.f32.mxu0 0.0
        %1195 = vmatmul.mubr.f32.gmra.mrb[0].mxu0 %v1128
        %v1196 = vpop.f32.mrb[0].mxu0
        %v1197 = vadd.f32 0.0, %v1196
        %v1198 = vpop.f32.mrb[0].mxu0
        %1199 = vdwg.mxu0
        %1200 = vrot.lane.b32.xlu0 %v596, 56
        %v1201 = vpop.permute.xlu0 %1200
        %v1204 = vsel %vm602, %v1123, 0
        %1206 = vmatprep.subr.mxu0 0.0
        %1207 = vmatpush1.msra.mxu0 %v1201
        %1208 = vmatprep.subr.mxu0 0.0
        %1209 = vmatpush1.msra.mxu0 0.0
        %1210 = vmatprep.subr.mxu0 0.0
        %1211 = vmatpush1.msra.mxu0 0.0
        %1212 = vmatprep.subr.mxu0 0.0
        %1213 = vmatpush1.msra.mxu0 0.0
        %1214 = vmatprep.subr.mxu0 0.0
        %1215 = vmatpush1.msra.mxu0 0.0
        %1216 = vmatprep.subr.mxu0 0.0
        %1217 = vmatpush1.msra.mxu0 0.0
        %1218 = vmatprep.subr.mxu0 0.0
        %1219 = vmatpush1.msra.mxu0 0.0
        %1220 = vmatprep.subr.mxu0 0.0
        %1221 = vmatpush1.msra.mxu0 0.0
        %1222 = vmatprep.subr.mxu0 0.0
        %1223 = vmatpush1.msra.mxu0 0.0
        %1224 = vmatprep.subr.mxu0 0.0
        %1225 = vmatpush1.msra.mxu0 0.0
        %1226 = vmatprep.subr.mxu0 0.0
        %1227 = vmatpush1.msra.mxu0 0.0
        %1228 = vmatprep.subr.mxu0 0.0
        %1229 = vmatpush1.msra.mxu0 0.0
        %1230 = vmatprep.subr.mxu0 0.0
        %1231 = vmatpush1.msra.mxu0 0.0
        %1232 = vmatprep.subr.mxu0 0.0
        %1233 = vmatpush1.msra.mxu0 0.0
        %1234 = vmatprep.subr.mxu0 0.0
        %1235 = vmatpush1.msra.mxu0 0.0
        %1236 = vmatprep.subr.mxu0 0.0
        %1237 = vmatpush1.msra.mxu0 0.0
        %1238 = vmatprep.subr.mxu0 0.0
        %1239 = vmatpush1.msra.mxu0 0.0
        %1240 = vmatprep.subr.mxu0 0.0
        %1241 = vmatpush1.msra.mxu0 0.0
        %1242 = vmatprep.subr.mxu0 0.0
        %1243 = vmatpush1.msra.mxu0 0.0
        %1244 = vmatprep.subr.mxu0 0.0
        %1245 = vmatpush1.msra.mxu0 0.0
        %1246 = vmatprep.subr.mxu0 0.0
        %1247 = vmatpush1.msra.mxu0 0.0
        %1248 = vmatprep.subr.mxu0 0.0
        %1249 = vmatpush1.msra.mxu0 0.0
        %1250 = vmatprep.subr.mxu0 0.0
        %1251 = vmatpush1.msra.mxu0 0.0
        %1252 = vmatprep.subr.mxu0 0.0
        %1253 = vmatpush1.msra.mxu0 0.0
        %1254 = vmatprep.subr.mxu0 0.0
        %1255 = vmatpush1.msra.mxu0 0.0
        %1256 = vmatprep.subr.mxu0 0.0
        %1257 = vmatpush1.msra.mxu0 0.0
        %1258 = vmatprep.subr.mxu0 0.0
        %1259 = vmatpush1.msra.mxu0 0.0
        %1260 = vmatprep.subr.mxu0 0.0
        %1261 = vmatpush1.msra.mxu0 0.0
        %1262 = vmatprep.subr.mxu0 0.0
        %1263 = vmatpush1.msra.mxu0 0.0
        %1264 = vmatprep.subr.mxu0 0.0
        %1265 = vmatpush1.msra.mxu0 0.0
        %1266 = vmatprep.subr.mxu0 0.0
        %1267 = vmatpush1.msra.mxu0 0.0
        %1268 = vmatprep.subr.mxu0 0.0
        %1269 = vmatpush1.msra.mxu0 0.0
        %1270 = vmatprep.mubr.f32.mxu0 0.0
        %1271 = vmatmul.mubr.f32.gmra.mrb[0].mxu0 %v1204
        %v1272 = vpop.f32.mrb[0].mxu0
        %v1273 = vadd.f32 0.0, %v1272
        %v1274 = vpop.f32.mrb[0].mxu0
        %1275 = vdwg.mxu0
        %1276 = vrot.lane.b32.xlu0 %v593, 112
        %v1277 = vpop.permute.xlu0 %1276
        %1278 = vrot.lane.b32.xlu0 %v593, 80
        %v1279 = vpop.permute.xlu0 %1278
        %v1280 = vsel %vm602, %v1277, 0
        %v1282 = vsel %vm602, %v1279, 0
        %1284 = vmatprep.subr.mxu0 0.0
        %1285 = vmatpush1.xpose.msra.mxu0 %v1282
        %1286 = vmatprep.subr.mxu0 0.0
        %1287 = vmatpush1.xpose.msra.mxu0 0.0
        %1288 = vmatprep.subr.mxu0 0.0
        %1289 = vmatpush1.xpose.msra.mxu0 0.0
        %1290 = vmatprep.subr.mxu0 0.0
        %1291 = vmatpush1.xpose.msra.mxu0 0.0
        %1292 = vmatprep.subr.mxu0 0.0
        %1293 = vmatpush1.xpose.msra.mxu0 0.0
        %1294 = vmatprep.subr.mxu0 0.0
        %1295 = vmatpush1.xpose.msra.mxu0 0.0
        %1296 = vmatprep.subr.mxu0 0.0
        %1297 = vmatpush1.xpose.msra.mxu0 0.0
        %1298 = vmatprep.subr.mxu0 0.0
        %1299 = vmatpush1.xpose.msra.mxu0 0.0
        %1300 = vmatprep.subr.mxu0 0.0
        %1301 = vmatpush1.xpose.msra.mxu0 0.0
        %1302 = vmatprep.subr.mxu0 0.0
        %1303 = vmatpush1.xpose.msra.mxu0 0.0
        %1304 = vmatprep.subr.mxu0 0.0
        %1305 = vmatpush1.xpose.msra.mxu0 0.0
        %1306 = vmatprep.subr.mxu0 0.0
        %1307 = vmatpush1.xpose.msra.mxu0 0.0
        %1308 = vmatprep.subr.mxu0 0.0
        %1309 = vmatpush1.xpose.msra.mxu0 0.0
        %1310 = vmatprep.subr.mxu0 0.0
        %1311 = vmatpush1.xpose.msra.mxu0 0.0
        %1312 = vmatprep.subr.mxu0 0.0
        %1313 = vmatpush1.xpose.msra.mxu0 0.0
        %1314 = vmatprep.subr.mxu0 0.0
        %1315 = vmatpush1.xpose.msra.mxu0 0.0
        %1316 = vmatprep.subr.mxu0 0.0
        %1317 = vmatpush1.xpose.msra.mxu0 0.0
        %1318 = vmatprep.subr.mxu0 0.0
        %1319 = vmatpush1.xpose.msra.mxu0 0.0
        %1320 = vmatprep.subr.mxu0 0.0
        %1321 = vmatpush1.xpose.msra.mxu0 0.0
        %1322 = vmatprep.subr.mxu0 0.0
        %1323 = vmatpush1.xpose.msra.mxu0 0.0
        %1324 = vmatprep.subr.mxu0 0.0
        %1325 = vmatpush1.xpose.msra.mxu0 0.0
        %1326 = vmatprep.subr.mxu0 0.0
        %1327 = vmatpush1.xpose.msra.mxu0 0.0
        %1328 = vmatprep.subr.mxu0 0.0
        %1329 = vmatpush1.xpose.msra.mxu0 0.0
        %1330 = vmatprep.subr.mxu0 0.0
        %1331 = vmatpush1.xpose.msra.mxu0 0.0
        %1332 = vmatprep.subr.mxu0 0.0
        %1333 = vmatpush1.xpose.msra.mxu0 0.0
        %1334 = vmatprep.subr.mxu0 0.0
        %1335 = vmatpush1.xpose.msra.mxu0 0.0
        %1336 = vmatprep.subr.mxu0 0.0
        %1337 = vmatpush1.xpose.msra.mxu0 0.0
        %1338 = vmatprep.subr.mxu0 0.0
        %1339 = vmatpush1.xpose.msra.mxu0 0.0
        %1340 = vmatprep.subr.mxu0 0.0
        %1341 = vmatpush1.xpose.msra.mxu0 0.0
        %1342 = vmatprep.subr.mxu0 0.0
        %1343 = vmatpush1.xpose.msra.mxu0 0.0
        %1344 = vmatprep.subr.mxu0 0.0
        %1345 = vmatpush1.xpose.msra.mxu0 0.0
        %1346 = vmatprep.subr.mxu0 0.0
        %1347 = vmatpush1.xpose.msra.mxu0 0.0
        %1348 = vmatprep.mubr.f32.mxu0 0.0
        %1349 = vmatmul.mubr.f32.gmra.mrb[0].mxu0 %v1280
        %v1350 = vpop.f32.mrb[0].mxu0
        %v1351 = vadd.f32 0.0, %v1350
        %v1352 = vpop.f32.mrb[0].mxu0
        %1353 = vdwg.mxu0
        %1354 = vrot.lane.b32.xlu0 %v596, 112
        %v1355 = vpop.permute.xlu0 %1354
        %1356 = vrot.lane.b32.xlu0 %v596, 80
        %v1357 = vpop.permute.xlu0 %1356
        %v1358 = vsel %vm602, %v1355, 0
        %v1360 = vsel %vm602, %v1357, 0
        %1362 = vmatprep.subr.mxu0 0.0
        %1363 = vmatpush1.xpose.msra.mxu0 %v1360
        %1364 = vmatprep.subr.mxu0 0.0
        %1365 = vmatpush1.xpose.msra.mxu0 0.0
        %1366 = vmatprep.subr.mxu0 0.0
        %1367 = vmatpush1.xpose.msra.mxu0 0.0
        %1368 = vmatprep.subr.mxu0 0.0
        %1369 = vmatpush1.xpose.msra.mxu0 0.0
        %1370 = vmatprep.subr.mxu0 0.0
        %1371 = vmatpush1.xpose.msra.mxu0 0.0
        %1372 = vmatprep.subr.mxu0 0.0
        %1373 = vmatpush1.xpose.msra.mxu0 0.0
        %1374 = vmatprep.subr.mxu0 0.0
        %1375 = vmatpush1.xpose.msra.mxu0 0.0
        %1376 = vmatprep.subr.mxu0 0.0
        %1377 = vmatpush1.xpose.msra.mxu0 0.0
        %1378 = vmatprep.subr.mxu0 0.0
        %1379 = vmatpush1.xpose.msra.mxu0 0.0
        %1380 = vmatprep.subr.mxu0 0.0
        %1381 = vmatpush1.xpose.msra.mxu0 0.0
        %1382 = vmatprep.subr.mxu0 0.0
        %1383 = vmatpush1.xpose.msra.mxu0 0.0
        %1384 = vmatprep.subr.mxu0 0.0
        %1385 = vmatpush1.xpose.msra.mxu0 0.0
        %1386 = vmatprep.subr.mxu0 0.0
        %1387 = vmatpush1.xpose.msra.mxu0 0.0
        %1388 = vmatprep.subr.mxu0 0.0
        %1389 = vmatpush1.xpose.msra.mxu0 0.0
        %1390 = vmatprep.subr.mxu0 0.0
        %1391 = vmatpush1.xpose.msra.mxu0 0.0
        %1392 = vmatprep.subr.mxu0 0.0
        %1393 = vmatpush1.xpose.msra.mxu0 0.0
        %1394 = vmatprep.subr.mxu0 0.0
        %1395 = vmatpush1.xpose.msra.mxu0 0.0
        %1396 = vmatprep.subr.mxu0 0.0
        %1397 = vmatpush1.xpose.msra.mxu0 0.0
        %1398 = vmatprep.subr.mxu0 0.0
        %1399 = vmatpush1.xpose.msra.mxu0 0.0
        %1400 = vmatprep.subr.mxu0 0.0
        %1401 = vmatpush1.xpose.msra.mxu0 0.0
        %1402 = vmatprep.subr.mxu0 0.0
        %1403 = vmatpush1.xpose.msra.mxu0 0.0
        %1404 = vmatprep.subr.mxu0 0.0
        %1405 = vmatpush1.xpose.msra.mxu0 0.0
        %1406 = vmatprep.subr.mxu0 0.0
        %1407 = vmatpush1.xpose.msra.mxu0 0.0
        %1408 = vmatprep.subr.mxu0 0.0
        %1409 = vmatpush1.xpose.msra.mxu0 0.0
        %1410 = vmatprep.subr.mxu0 0.0
        %1411 = vmatpush1.xpose.msra.mxu0 0.0
        %1412 = vmatprep.subr.mxu0 0.0
        %1413 = vmatpush1.xpose.msra.mxu0 0.0
        %1414 = vmatprep.subr.mxu0 0.0
        %1415 = vmatpush1.xpose.msra.mxu0 0.0
        %1416 = vmatprep.subr.mxu0 0.0
        %1417 = vmatpush1.xpose.msra.mxu0 0.0
        %1418 = vmatprep.subr.mxu0 0.0
        %1419 = vmatpush1.xpose.msra.mxu0 0.0
        %1420 = vmatprep.subr.mxu0 0.0
        %1421 = vmatpush1.xpose.msra.mxu0 0.0
        %1422 = vmatprep.subr.mxu0 0.0
        %1423 = vmatpush1.xpose.msra.mxu0 0.0
        %1424 = vmatprep.subr.mxu0 0.0
        %1425 = vmatpush1.xpose.msra.mxu0 0.0
        %1426 = vmatprep.mubr.f32.mxu0 0.0
        %1427 = vmatmul.mubr.f32.gmra.mrb[0].mxu0 %v1358
        %v1428 = vpop.f32.mrb[0].mxu0
        %v1429 = vadd.f32 0.0, %v1428
        %v1430 = vpop.f32.mrb[0].mxu0
        %1431 = vdwg.mxu0
        %v1432 = vmul.f32 %v1351, 0.35355338
        %v1433 = vmul.f32 %v1429, 0.35355338
        %v1434 = vadd.f32 %v1432, %v759
        %v1435 = vadd.f32 %v1433, %v763
        %v1436 = vsel %vm602, %v1434, -inf
        %1437 = vmax.xlane.f32.xlu0 %v1436
        %v1438 = vpop.xlane.xlu0 %1437
        %v1439 = vsel %vm602, %v1435, -inf
        %1440 = vmax.xlane.f32.xlu0 %v1439
        %v1441 = vpop.xlane.xlu0 %1440
        %v1442 = vsub.f32 %v1434, %v1438
        %v1443 = vsub.f32 %v1435, %v1441
        %v1444 = vmul.f32 %v1442, 1.442695
        %v1445 = vpow.pop %v1444
        %v1446 = vmul.f32 %v1443, 1.442695
        %v1447 = vpow.pop %v1446
        %v1448 = vsel %vm602, %v1445, 0.0
        %1449 = vadd.xlane.f32.xlu0 %v1448
        %v1450 = vpop.xlane.xlu0 %1449
        %v1451 = vsel %vm602, %v1447, 0.0
        %1452 = vadd.xlane.f32.xlu0 %v1451
        %v1453 = vpop.xlane.xlu0 %1452
        %v1454 = vrcp.pop %v1450
        %v1455 = vrcp.pop %v1453
        %v1456 = vmul.f32 %v1445, %v1454
        %v1457 = vmul.f32 %v1447, %v1455
        %1458 = vrot.lane.b32.xlu0 %v593, 48
        %v1459 = vpop.permute.xlu0 %1458
        %v1462 = vsel %vm602, %v1456, 0
        %1464 = vmatprep.subr.mxu0 0.0
        %1465 = vmatpush1.msra.mxu0 %v1459
        %1466 = vmatprep.subr.mxu0 0.0
        %1467 = vmatpush1.msra.mxu0 0.0
        %1468 = vmatprep.subr.mxu0 0.0
        %1469 = vmatpush1.msra.mxu0 0.0
        %1470 = vmatprep.subr.mxu0 0.0
        %1471 = vmatpush1.msra.mxu0 0.0
        %1472 = vmatprep.subr.mxu0 0.0
        %1473 = vmatpush1.msra.mxu0 0.0
        %1474 = vmatprep.subr.mxu0 0.0
        %1475 = vmatpush1.msra.mxu0 0.0
        %1476 = vmatprep.subr.mxu0 0.0
        %1477 = vmatpush1.msra.mxu0 0.0
        %1478 = vmatprep.subr.mxu0 0.0
        %1479 = vmatpush1.msra.mxu0 0.0
        %1480 = vmatprep.subr.mxu0 0.0
        %1481 = vmatpush1.msra.mxu0 0.0
        %1482 = vmatprep.subr.mxu0 0.0
        %1483 = vmatpush1.msra.mxu0 0.0
        %1484 = vmatprep.subr.mxu0 0.0
        %1485 = vmatpush1.msra.mxu0 0.0
        %1486 = vmatprep.subr.mxu0 0.0
        %1487 = vmatpush1.msra.mxu0 0.0
        %1488 = vmatprep.subr.mxu0 0.0
        %1489 = vmatpush1.msra.mxu0 0.0
        %1490 = vmatprep.subr.mxu0 0.0
        %1491 = vmatpush1.msra.mxu0 0.0
        %1492 = vmatprep.subr.mxu0 0.0
        %1493 = vmatpush1.msra.mxu0 0.0
        %1494 = vmatprep.subr.mxu0 0.0
        %1495 = vmatpush1.msra.mxu0 0.0
        %1496 = vmatprep.subr.mxu0 0.0
        %1497 = vmatpush1.msra.mxu0 0.0
        %1498 = vmatprep.subr.mxu0 0.0
        %1499 = vmatpush1.msra.mxu0 0.0
        %1500 = vmatprep.subr.mxu0 0.0
        %1501 = vmatpush1.msra.mxu0 0.0
        %1502 = vmatprep.subr.mxu0 0.0
        %1503 = vmatpush1.msra.mxu0 0.0
        %1504 = vmatprep.subr.mxu0 0.0
        %1505 = vmatpush1.msra.mxu0 0.0
        %1506 = vmatprep.subr.mxu0 0.0
        %1507 = vmatpush1.msra.mxu0 0.0
        %1508 = vmatprep.subr.mxu0 0.0
        %1509 = vmatpush1.msra.mxu0 0.0
        %1510 = vmatprep.subr.mxu0 0.0
        %1511 = vmatpush1.msra.mxu0 0.0
        %1512 = vmatprep.subr.mxu0 0.0
        %1513 = vmatpush1.msra.mxu0 0.0
        %1514 = vmatprep.subr.mxu0 0.0
        %1515 = vmatpush1.msra.mxu0 0.0
        %1516 = vmatprep.subr.mxu0 0.0
        %1517 = vmatpush1.msra.mxu0 0.0
        %1518 = vmatprep.subr.mxu0 0.0
        %1519 = vmatpush1.msra.mxu0 0.0
        %1520 = vmatprep.subr.mxu0 0.0
        %1521 = vmatpush1.msra.mxu0 0.0
        %1522 = vmatprep.subr.mxu0 0.0
        %1523 = vmatpush1.msra.mxu0 0.0
        %1524 = vmatprep.subr.mxu0 0.0
        %1525 = vmatpush1.msra.mxu0 0.0
        %1526 = vmatprep.subr.mxu0 0.0
        %1527 = vmatpush1.msra.mxu0 0.0
        %1528 = vmatprep.mubr.f32.mxu0 0.0
        %1529 = vmatmul.mubr.f32.gmra.mrb[0].mxu0 %v1462
        %v1530 = vpop.f32.mrb[0].mxu0
        %v1531 = vadd.f32 0.0, %v1530
        %v1532 = vpop.f32.mrb[0].mxu0
        %1533 = vdwg.mxu0
        %1534 = vrot.lane.b32.xlu0 %v596, 48
        %v1535 = vpop.permute.xlu0 %1534
        %v1538 = vsel %vm602, %v1457, 0
        %1540 = vmatprep.subr.mxu0 0.0
        %1541 = vmatpush1.msra.mxu0 %v1535
        %1542 = vmatprep.subr.mxu0 0.0
        %1543 = vmatpush1.msra.mxu0 0.0
        %1544 = vmatprep.subr.mxu0 0.0
        %1545 = vmatpush1.msra.mxu0 0.0
        %1546 = vmatprep.subr.mxu0 0.0
        %1547 = vmatpush1.msra.mxu0 0.0
        %1548 = vmatprep.subr.mxu0 0.0
        %1549 = vmatpush1.msra.mxu0 0.0
        %1550 = vmatprep.subr.mxu0 0.0
        %1551 = vmatpush1.msra.mxu0 0.0
        %1552 = vmatprep.subr.mxu0 0.0
        %1553 = vmatpush1.msra.mxu0 0.0
        %1554 = vmatprep.subr.mxu0 0.0
        %1555 = vmatpush1.msra.mxu0 0.0
        %1556 = vmatprep.subr.mxu0 0.0
        %1557 = vmatpush1.msra.mxu0 0.0
        %1558 = vmatprep.subr.mxu0 0.0
        %1559 = vmatpush1.msra.mxu0 0.0
        %1560 = vmatprep.subr.mxu0 0.0
        %1561 = vmatpush1.msra.mxu0 0.0
        %1562 = vmatprep.subr.mxu0 0.0
        %1563 = vmatpush1.msra.mxu0 0.0
        %1564 = vmatprep.subr.mxu0 0.0
        %1565 = vmatpush1.msra.mxu0 0.0
        %1566 = vmatprep.subr.mxu0 0.0
        %1567 = vmatpush1.msra.mxu0 0.0
        %1568 = vmatprep.subr.mxu0 0.0
        %1569 = vmatpush1.msra.mxu0 0.0
        %1570 = vmatprep.subr.mxu0 0.0
        %1571 = vmatpush1.msra.mxu0 0.0
        %1572 = vmatprep.subr.mxu0 0.0
        %1573 = vmatpush1.msra.mxu0 0.0
        %1574 = vmatprep.subr.mxu0 0.0
        %1575 = vmatpush1.msra.mxu0 0.0
        %1576 = vmatprep.subr.mxu0 0.0
        %1577 = vmatpush1.msra.mxu0 0.0
        %1578 = vmatprep.subr.mxu0 0.0
        %1579 = vmatpush1.msra.mxu0 0.0
        %1580 = vmatprep.subr.mxu0 0.0
        %1581 = vmatpush1.msra.mxu0 0.0
        %1582 = vmatprep.subr.mxu0 0.0
        %1583 = vmatpush1.msra.mxu0 0.0
        %1584 = vmatprep.subr.mxu0 0.0
        %1585 = vmatpush1.msra.mxu0 0.0
        %1586 = vmatprep.subr.mxu0 0.0
        %1587 = vmatpush1.msra.mxu0 0.0
        %1588 = vmatprep.subr.mxu0 0.0
        %1589 = vmatpush1.msra.mxu0 0.0
        %1590 = vmatprep.subr.mxu0 0.0
        %1591 = vmatpush1.msra.mxu0 0.0
        %1592 = vmatprep.subr.mxu0 0.0
        %1593 = vmatpush1.msra.mxu0 0.0
        %1594 = vmatprep.subr.mxu0 0.0
        %1595 = vmatpush1.msra.mxu0 0.0
        %1596 = vmatprep.subr.mxu0 0.0
        %1597 = vmatpush1.msra.mxu0 0.0
        %1598 = vmatprep.subr.mxu0 0.0
        %1599 = vmatpush1.msra.mxu0 0.0
        %1600 = vmatprep.subr.mxu0 0.0
        %1601 = vmatpush1.msra.mxu0 0.0
        %1602 = vmatprep.subr.mxu0 0.0
        %1603 = vmatpush1.msra.mxu0 0.0
        %1604 = vmatprep.mubr.f32.mxu0 0.0
        %1605 = vmatmul.mubr.f32.gmra.mrb[0].mxu0 %v1538
        %v1606 = vpop.f32.mrb[0].mxu0
        %v1607 = vadd.f32 0.0, %v1606
        %v1608 = vpop.f32.mrb[0].mxu0
        %1609 = vdwg.mxu0
        %1610 = vrot.lane.b32.xlu0 %v593, 104
        %v1611 = vpop.permute.xlu0 %1610
        %1612 = vrot.lane.b32.xlu0 %v593, 72
        %v1613 = vpop.permute.xlu0 %1612
        %v1614 = vsel %vm602, %v1611, 0
        %v1616 = vsel %vm602, %v1613, 0
        %1618 = vmatprep.subr.mxu0 0.0
        %1619 = vmatpush1.xpose.msra.mxu0 %v1616
        %1620 = vmatprep.subr.mxu0 0.0
        %1621 = vmatpush1.xpose.msra.mxu0 0.0
        %1622 = vmatprep.subr.mxu0 0.0
        %1623 = vmatpush1.xpose.msra.mxu0 0.0
        %1624 = vmatprep.subr.mxu0 0.0
        %1625 = vmatpush1.xpose.msra.mxu0 0.0
        %1626 = vmatprep.subr.mxu0 0.0
        %1627 = vmatpush1.xpose.msra.mxu0 0.0
        %1628 = vmatprep.subr.mxu0 0.0
        %1629 = vmatpush1.xpose.msra.mxu0 0.0
        %1630 = vmatprep.subr.mxu0 0.0
        %1631 = vmatpush1.xpose.msra.mxu0 0.0
        %1632 = vmatprep.subr.mxu0 0.0
        %1633 = vmatpush1.xpose.msra.mxu0 0.0
        %1634 = vmatprep.subr.mxu0 0.0
        %1635 = vmatpush1.xpose.msra.mxu0 0.0
        %1636 = vmatprep.subr.mxu0 0.0
        %1637 = vmatpush1.xpose.msra.mxu0 0.0
        %1638 = vmatprep.subr.mxu0 0.0
        %1639 = vmatpush1.xpose.msra.mxu0 0.0
        %1640 = vmatprep.subr.mxu0 0.0
        %1641 = vmatpush1.xpose.msra.mxu0 0.0
        %1642 = vmatprep.subr.mxu0 0.0
        %1643 = vmatpush1.xpose.msra.mxu0 0.0
        %1644 = vmatprep.subr.mxu0 0.0
        %1645 = vmatpush1.xpose.msra.mxu0 0.0
        %1646 = vmatprep.subr.mxu0 0.0
        %1647 = vmatpush1.xpose.msra.mxu0 0.0
        %1648 = vmatprep.subr.mxu0 0.0
        %1649 = vmatpush1.xpose.msra.mxu0 0.0
        %1650 = vmatprep.subr.mxu0 0.0
        %1651 = vmatpush1.xpose.msra.mxu0 0.0
        %1652 = vmatprep.subr.mxu0 0.0
        %1653 = vmatpush1.xpose.msra.mxu0 0.0
        %1654 = vmatprep.subr.mxu0 0.0
        %1655 = vmatpush1.xpose.msra.mxu0 0.0
        %1656 = vmatprep.subr.mxu0 0.0
        %1657 = vmatpush1.xpose.msra.mxu0 0.0
        %1658 = vmatprep.subr.mxu0 0.0
        %1659 = vmatpush1.xpose.msra.mxu0 0.0
        %1660 = vmatprep.subr.mxu0 0.0
        %1661 = vmatpush1.xpose.msra.mxu0 0.0
        %1662 = vmatprep.subr.mxu0 0.0
        %1663 = vmatpush1.xpose.msra.mxu0 0.0
        %1664 = vmatprep.subr.mxu0 0.0
        %1665 = vmatpush1.xpose.msra.mxu0 0.0
        %1666 = vmatprep.subr.mxu0 0.0
        %1667 = vmatpush1.xpose.msra.mxu0 0.0
        %1668 = vmatprep.subr.mxu0 0.0
        %1669 = vmatpush1.xpose.msra.mxu0 0.0
        %1670 = vmatprep.subr.mxu0 0.0
        %1671 = vmatpush1.xpose.msra.mxu0 0.0
        %1672 = vmatprep.subr.mxu0 0.0
        %1673 = vmatpush1.xpose.msra.mxu0 0.0
        %1674 = vmatprep.subr.mxu0 0.0
        %1675 = vmatpush1.xpose.msra.mxu0 0.0
        %1676 = vmatprep.subr.mxu0 0.0
        %1677 = vmatpush1.xpose.msra.mxu0 0.0
        %1678 = vmatprep.subr.mxu0 0.0
        %1679 = vmatpush1.xpose.msra.mxu0 0.0
        %1680 = vmatprep.subr.mxu0 0.0
        %1681 = vmatpush1.xpose.msra.mxu0 0.0
        %1682 = vmatprep.mubr.f32.mxu0 0.0
        %1683 = vmatmul.mubr.f32.gmra.mrb[0].mxu0 %v1614
        %v1684 = vpop.f32.mrb[0].mxu0
        %v1685 = vadd.f32 0.0, %v1684
        %v1686 = vpop.f32.mrb[0].mxu0
        %1687 = vdwg.mxu0
        %1688 = vrot.lane.b32.xlu0 %v596, 104
        %v1689 = vpop.permute.xlu0 %1688
        %1690 = vrot.lane.b32.xlu0 %v596, 72
        %v1691 = vpop.permute.xlu0 %1690
        %v1692 = vsel %vm602, %v1689, 0
        %v1694 = vsel %vm602, %v1691, 0
        %1696 = vmatprep.subr.mxu0 0.0
        %1697 = vmatpush1.xpose.msra.mxu0 %v1694
        %1698 = vmatprep.subr.mxu0 0.0
        %1699 = vmatpush1.xpose.msra.mxu0 0.0
        %1700 = vmatprep.subr.mxu0 0.0
        %1701 = vmatpush1.xpose.msra.mxu0 0.0
        %1702 = vmatprep.subr.mxu0 0.0
        %1703 = vmatpush1.xpose.msra.mxu0 0.0
        %1704 = vmatprep.subr.mxu0 0.0
        %1705 = vmatpush1.xpose.msra.mxu0 0.0
        %1706 = vmatprep.subr.mxu0 0.0
        %1707 = vmatpush1.xpose.msra.mxu0 0.0
        %1708 = vmatprep.subr.mxu0 0.0
        %1709 = vmatpush1.xpose.msra.mxu0 0.0
        %1710 = vmatprep.subr.mxu0 0.0
        %1711 = vmatpush1.xpose.msra.mxu0 0.0
        %1712 = vmatprep.subr.mxu0 0.0
        %1713 = vmatpush1.xpose.msra.mxu0 0.0
        %1714 = vmatprep.subr.mxu0 0.0
        %1715 = vmatpush1.xpose.msra.mxu0 0.0
        %1716 = vmatprep.subr.mxu0 0.0
        %1717 = vmatpush1.xpose.msra.mxu0 0.0
        %1718 = vmatprep.subr.mxu0 0.0
        %1719 = vmatpush1.xpose.msra.mxu0 0.0
        %1720 = vmatprep.subr.mxu0 0.0
        %1721 = vmatpush1.xpose.msra.mxu0 0.0
        %1722 = vmatprep.subr.mxu0 0.0
        %1723 = vmatpush1.xpose.msra.mxu0 0.0
        %1724 = vmatprep.subr.mxu0 0.0
        %1725 = vmatpush1.xpose.msra.mxu0 0.0
        %1726 = vmatprep.subr.mxu0 0.0
        %1727 = vmatpush1.xpose.msra.mxu0 0.0
        %1728 = vmatprep.subr.mxu0 0.0
        %1729 = vmatpush1.xpose.msra.mxu0 0.0
        %1730 = vmatprep.subr.mxu0 0.0
        %1731 = vmatpush1.xpose.msra.mxu0 0.0
        %1732 = vmatprep.subr.mxu0 0.0
        %1733 = vmatpush1.xpose.msra.mxu0 0.0
        %1734 = vmatprep.subr.mxu0 0.0
        %1735 = vmatpush1.xpose.msra.mxu0 0.0
        %1736 = vmatprep.subr.mxu0 0.0
        %1737 = vmatpush1.xpose.msra.mxu0 0.0
        %1738 = vmatprep.subr.mxu0 0.0
        %1739 = vmatpush1.xpose.msra.mxu0 0.0
        %1740 = vmatprep.subr.mxu0 0.0
        %1741 = vmatpush1.xpose.msra.mxu0 0.0
        %1742 = vmatprep.subr.mxu0 0.0
        %1743 = vmatpush1.xpose.msra.mxu0 0.0
        %1744 = vmatprep.subr.mxu0 0.0
        %1745 = vmatpush1.xpose.msra.mxu0 0.0
        %1746 = vmatprep.subr.mxu0 0.0
        %1747 = vmatpush1.xpose.msra.mxu0 0.0
        %1748 = vmatprep.subr.mxu0 0.0
        %1749 = vmatpush1.xpose.msra.mxu0 0.0
        %1750 = vmatprep.subr.mxu0 0.0
        %1751 = vmatpush1.xpose.msra.mxu0 0.0
        %1752 = vmatprep.subr.mxu0 0.0
        %1753 = vmatpush1.xpose.msra.mxu0 0.0
        %1754 = vmatprep.subr.mxu0 0.0
        %1755 = vmatpush1.xpose.msra.mxu0 0.0
        %1756 = vmatprep.subr.mxu0 0.0
        %1757 = vmatpush1.xpose.msra.mxu0 0.0
        %1758 = vmatprep.subr.mxu0 0.0
        %1759 = vmatpush1.xpose.msra.mxu0 0.0
        %1760 = vmatprep.mubr.f32.mxu0 0.0
        %1761 = vmatmul.mubr.f32.gmra.mrb[0].mxu0 %v1692
        %v1762 = vpop.f32.mrb[0].mxu0
        %v1763 = vadd.f32 0.0, %v1762
        %v1764 = vpop.f32.mrb[0].mxu0
        %1765 = vdwg.mxu0
        %v1766 = vmul.f32 %v1685, 0.35355338
        %v1767 = vmul.f32 %v1763, 0.35355338
        %v1768 = vadd.f32 %v1766, %v759
        %v1769 = vadd.f32 %v1767, %v763
        %v1770 = vsel %vm602, %v1768, -inf
        %1771 = vmax.xlane.f32.xlu0 %v1770
        %v1772 = vpop.xlane.xlu0 %1771
        %v1773 = vsel %vm602, %v1769, -inf
        %1774 = vmax.xlane.f32.xlu0 %v1773
        %v1775 = vpop.xlane.xlu0 %1774
        %v1776 = vsub.f32 %v1768, %v1772
        %v1777 = vsub.f32 %v1769, %v1775
        %v1778 = vmul.f32 %v1776, 1.442695
        %v1779 = vpow.pop %v1778
        %v1780 = vmul.f32 %v1777, 1.442695
        %v1781 = vpow.pop %v1780
        %v1782 = vsel %vm602, %v1779, 0.0
        %1783 = vadd.xlane.f32.xlu0 %v1782
        %v1784 = vpop.xlane.xlu0 %1783
        %v1785 = vsel %vm602, %v1781, 0.0
        %1786 = vadd.xlane.f32.xlu0 %v1785
        %v1787 = vpop.xlane.xlu0 %1786
        %v1788 = vrcp.pop %v1784
        %v1789 = vrcp.pop %v1787
        %v1790 = vmul.f32 %v1779, %v1788
        %v1791 = vmul.f32 %v1781, %v1789
        %1792 = vrot.lane.b32.xlu0 %v593, 40
        %v1793 = vpop.permute.xlu0 %1792
        %v1796 = vsel %vm602, %v1790, 0
        %1798 = vmatprep.subr.mxu0 0.0
        %1799 = vmatpush1.msra.mxu0 %v1793
        %1800 = vmatprep.subr.mxu0 0.0
        %1801 = vmatpush1.msra.mxu0 0.0
        %1802 = vmatprep.subr.mxu0 0.0
        %1803 = vmatpush1.msra.mxu0 0.0
        %1804 = vmatprep.subr.mxu0 0.0
        %1805 = vmatpush1.msra.mxu0 0.0
        %1806 = vmatprep.subr.mxu0 0.0
        %1807 = vmatpush1.msra.mxu0 0.0
        %1808 = vmatprep.subr.mxu0 0.0
        %1809 = vmatpush1.msra.mxu0 0.0
        %1810 = vmatprep.subr.mxu0 0.0
        %1811 = vmatpush1.msra.mxu0 0.0
        %1812 = vmatprep.subr.mxu0 0.0
        %1813 = vmatpush1.msra.mxu0 0.0
        %1814 = vmatprep.subr.mxu0 0.0
        %1815 = vmatpush1.msra.mxu0 0.0
        %1816 = vmatprep.subr.mxu0 0.0
        %1817 = vmatpush1.msra.mxu0 0.0
        %1818 = vmatprep.subr.mxu0 0.0
        %1819 = vmatpush1.msra.mxu0 0.0
        %1820 = vmatprep.subr.mxu0 0.0
        %1821 = vmatpush1.msra.mxu0 0.0
        %1822 = vmatprep.subr.mxu0 0.0
        %1823 = vmatpush1.msra.mxu0 0.0
        %1824 = vmatprep.subr.mxu0 0.0
        %1825 = vmatpush1.msra.mxu0 0.0
        %1826 = vmatprep.subr.mxu0 0.0
        %1827 = vmatpush1.msra.mxu0 0.0
        %1828 = vmatprep.subr.mxu0 0.0
        %1829 = vmatpush1.msra.mxu0 0.0
        %1830 = vmatprep.subr.mxu0 0.0
        %1831 = vmatpush1.msra.mxu0 0.0
        %1832 = vmatprep.subr.mxu0 0.0
        %1833 = vmatpush1.msra.mxu0 0.0
        %1834 = vmatprep.subr.mxu0 0.0
        %1835 = vmatpush1.msra.mxu0 0.0
        %1836 = vmatprep.subr.mxu0 0.0
        %1837 = vmatpush1.msra.mxu0 0.0
        %1838 = vmatprep.subr.mxu0 0.0
        %1839 = vmatpush1.msra.mxu0 0.0
        %1840 = vmatprep.subr.mxu0 0.0
        %1841 = vmatpush1.msra.mxu0 0.0
        %1842 = vmatprep.subr.mxu0 0.0
        %1843 = vmatpush1.msra.mxu0 0.0
        %1844 = vmatprep.subr.mxu0 0.0
        %1845 = vmatpush1.msra.mxu0 0.0
        %1846 = vmatprep.subr.mxu0 0.0
        %1847 = vmatpush1.msra.mxu0 0.0
        %1848 = vmatprep.subr.mxu0 0.0
        %1849 = vmatpush1.msra.mxu0 0.0
        %1850 = vmatprep.subr.mxu0 0.0
        %1851 = vmatpush1.msra.mxu0 0.0
        %1852 = vmatprep.subr.mxu0 0.0
        %1853 = vmatpush1.msra.mxu0 0.0
        %1854 = vmatprep.subr.mxu0 0.0
        %1855 = vmatpush1.msra.mxu0 0.0
        %1856 = vmatprep.subr.mxu0 0.0
        %1857 = vmatpush1.msra.mxu0 0.0
        %1858 = vmatprep.subr.mxu0 0.0
        %1859 = vmatpush1.msra.mxu0 0.0
        %1860 = vmatprep.subr.mxu0 0.0
        %1861 = vmatpush1.msra.mxu0 0.0
        %1862 = vmatprep.mubr.f32.mxu0 0.0
        %1863 = vmatmul.mubr.f32.gmra.mrb[0].mxu0 %v1796
        %v1864 = vpop.f32.mrb[0].mxu0
        %v1865 = vadd.f32 0.0, %v1864
        %v1866 = vpop.f32.mrb[0].mxu0
        %1867 = vdwg.mxu0
        %1868 = vrot.lane.b32.xlu0 %v596, 40
        %v1869 = vpop.permute.xlu0 %1868
        %v1872 = vsel %vm602, %v1791, 0
        %1874 = vmatprep.subr.mxu0 0.0
        %1875 = vmatpush1.msra.mxu0 %v1869
        %1876 = vmatprep.subr.mxu0 0.0
        %1877 = vmatpush1.msra.mxu0 0.0
        %1878 = vmatprep.subr.mxu0 0.0
        %1879 = vmatpush1.msra.mxu0 0.0
        %1880 = vmatprep.subr.mxu0 0.0
        %1881 = vmatpush1.msra.mxu0 0.0
        %1882 = vmatprep.subr.mxu0 0.0
        %1883 = vmatpush1.msra.mxu0 0.0
        %1884 = vmatprep.subr.mxu0 0.0
        %1885 = vmatpush1.msra.mxu0 0.0
        %1886 = vmatprep.subr.mxu0 0.0
        %1887 = vmatpush1.msra.mxu0 0.0
        %1888 = vmatprep.subr.mxu0 0.0
        %1889 = vmatpush1.msra.mxu0 0.0
        %1890 = vmatprep.subr.mxu0 0.0
        %1891 = vmatpush1.msra.mxu0 0.0
        %1892 = vmatprep.subr.mxu0 0.0
        %1893 = vmatpush1.msra.mxu0 0.0
        %1894 = vmatprep.subr.mxu0 0.0
        %1895 = vmatpush1.msra.mxu0 0.0
        %1896 = vmatprep.subr.mxu0 0.0
        %1897 = vmatpush1.msra.mxu0 0.0
        %1898 = vmatprep.subr.mxu0 0.0
        %1899 = vmatpush1.msra.mxu0 0.0
        %1900 = vmatprep.subr.mxu0 0.0
        %1901 = vmatpush1.msra.mxu0 0.0
        %1902 = vmatprep.subr.mxu0 0.0
        %1903 = vmatpush1.msra.mxu0 0.0
        %1904 = vmatprep.subr.mxu0 0.0
        %1905 = vmatpush1.msra.mxu0 0.0
        %1906 = vmatprep.subr.mxu0 0.0
        %1907 = vmatpush1.msra.mxu0 0.0
        %1908 = vmatprep.subr.mxu0 0.0
        %1909 = vmatpush1.msra.mxu0 0.0
        %1910 = vmatprep.subr.mxu0 0.0
        %1911 = vmatpush1.msra.mxu0 0.0
        %1912 = vmatprep.subr.mxu0 0.0
        %1913 = vmatpush1.msra.mxu0 0.0
        %1914 = vmatprep.subr.mxu0 0.0
        %1915 = vmatpush1.msra.mxu0 0.0
        %1916 = vmatprep.subr.mxu0 0.0
        %1917 = vmatpush1.msra.mxu0 0.0
        %1918 = vmatprep.subr.mxu0 0.0
        %1919 = vmatpush1.msra.mxu0 0.0
        %1920 = vmatprep.subr.mxu0 0.0
        %1921 = vmatpush1.msra.mxu0 0.0
        %1922 = vmatprep.subr.mxu0 0.0
        %1923 = vmatpush1.msra.mxu0 0.0
        %1924 = vmatprep.subr.mxu0 0.0
        %1925 = vmatpush1.msra.mxu0 0.0
        %1926 = vmatprep.subr.mxu0 0.0
        %1927 = vmatpush1.msra.mxu0 0.0
        %1928 = vmatprep.subr.mxu0 0.0
        %1929 = vmatpush1.msra.mxu0 0.0
        %1930 = vmatprep.subr.mxu0 0.0
        %1931 = vmatpush1.msra.mxu0 0.0
        %1932 = vmatprep.subr.mxu0 0.0
        %1933 = vmatpush1.msra.mxu0 0.0
        %1934 = vmatprep.subr.mxu0 0.0
        %1935 = vmatpush1.msra.mxu0 0.0
        %1936 = vmatprep.subr.mxu0 0.0
        %1937 = vmatpush1.msra.mxu0 0.0
        %1938 = vmatprep.mubr.f32.mxu0 0.0
        %1939 = vmatmul.mubr.f32.gmra.mrb[0].mxu0 %v1872
        %v1940 = vpop.f32.mrb[0].mxu0
        %v1941 = vadd.f32 0.0, %v1940
        %v1942 = vpop.f32.mrb[0].mxu0
        %1943 = vdwg.mxu0
        %1946 = vrot.lane.b32.xlu0 %v1197, 8
        %v1947 = vpop.permute.xlu0 %1946
        %1948 = vrot.lane.b32.xlu0 %v1273, 8
        %v1949 = vpop.permute.xlu0 %1948
        %1954 = vrot.lane.b32.xlu0 %v1531, 16
        %v1955 = vpop.permute.xlu0 %1954
        %1956 = vrot.lane.b32.xlu0 %v1607, 16
        %v1957 = vpop.permute.xlu0 %1956
        %1962 = vrot.lane.b32.xlu0 %v1865, 24
        %v1963 = vpop.permute.xlu0 %1962
        %1964 = vrot.lane.b32.xlu0 %v1941, 24
        %v1965 = vpop.permute.xlu0 %1964
        %v1968 = vsel %vm602, %v863, %v1947
        %v1969 = vsel %vm602, %v939, %v1949
        %vm1970 = vcmask 130048
        %v1971 = vsel %vm1970, %v1968, %v1955
        %v1972 = vsel %vm1970, %v1969, %v1957
        %vm1973 = vcmask 195584
        %v1974 = vsel %vm1973, %v1971, %v1963
        %v1975 = vsel %vm1973, %v1972, %v1965
        %v1976 = vpack.c.bf16 %v1975, %v1974
        %v1977 = vld [vmem:[%s433] sm:$0xf]
        %v1978 = vld [vmem:[%s433 + $0x4] sm:$0xf]
        %v1979 = vld [vmem:[%s433 + $0x8] sm:$0xf]
        %v1980 = vld [vmem:[%s433 + $0xc] sm:$0xf]
        %v1981 = vld [vmem:[%s450] sm:$0x1]
        %v1982 = vlaneseq
        %v1983 = vshrl.u32 %v1982, 7
        %v1984 = vsub.s32 0, %v1983
        %v1985 = vrot.slane %v1981, %v1984
        %v1990 = vunpack.c.l.b16 %v1977
        %v1991 = vunpack.c.l.b16 %v1978
        %v1992 = vunpack.c.l.b16 %v1979
        %v1993 = vunpack.c.l.b16 %v1980
        %v1994 = vpack.c.b16 %v1991, %v1990
        %v1995 = vpack.c.b16 %v1993, %v1992
        %v1999 = vsel %vm554, %v1976, 0
        %2001 = vmatprep.subr.bf16.mxu0 0
        %2002 = vmatpush1.bf16.msra.mxu0 %v1994
        %2003 = vmatprep.subr.bf16.mxu0 0
        %2004 = vmatpush1.bf16.msra.mxu0 %v1995
        %2005 = vmatprep.subr.bf16.mxu0 0
        %2006 = vmatpush1.bf16.msra.mxu0 0
        %2007 = vmatprep.subr.bf16.mxu0 0
        %2008 = vmatpush1.bf16.msra.mxu0 0
        %2009 = vmatprep.subr.bf16.mxu0 0
        %2010 = vmatpush1.bf16.msra.mxu0 0
        %2011 = vmatprep.subr.bf16.mxu0 0
        %2012 = vmatpush1.bf16.msra.mxu0 0
        %2013 = vmatprep.subr.bf16.mxu0 0
        %2014 = vmatpush1.bf16.msra.mxu0 0
        %2015 = vmatprep.subr.bf16.mxu0 0
        %2016 = vmatpush1.bf16.msra.mxu0 0
        %2017 = vmatprep.subr.bf16.mxu0 0
        %2018 = vmatpush1.bf16.msra.mxu0 0
        %2019 = vmatprep.subr.bf16.mxu0 0
        %2020 = vmatpush1.bf16.msra.mxu0 0
        %2021 = vmatprep.subr.bf16.mxu0 0
        %2022 = vmatpush1.bf16.msra.mxu0 0
        %2023 = vmatprep.subr.bf16.mxu0 0
        %2024 = vmatpush1.bf16.msra.mxu0 0
        %2025 = vmatprep.subr.bf16.mxu0 0
        %2026 = vmatpush1.bf16.msra.mxu0 0
        %2027 = vmatprep.subr.bf16.mxu0 0
        %2028 = vmatpush1.bf16.msra.mxu0 0
        %2029 = vmatprep.subr.bf16.mxu0 0
        %2030 = vmatpush1.bf16.msra.mxu0 0
        %2031 = vmatprep.subr.bf16.mxu0 0
        %2032 = vmatpush1.bf16.msra.mxu0 0
        %2033 = vmatprep.mubr.bf16.mxu0 0
        %2034 = vmatmul.mubr.bf16.gmra.mrb[0].mxu0 %v1999
        %v2035 = vpop.f32.mrb[0].mxu0
        %v2036 = vadd.f32 %v1985, %v2035
        %v2037 = vpop.f32.mrb[0].mxu0
        %v2038 = vpop.f32.mrb[0].mxu0
        %v2039 = vadd.f32 %v1985, %v2038
        %v2040 = vpop.f32.mrb[0].mxu0
        %2041 = vdwg.mxu0
        %v2042 = vadd.f32 %v502, %v2036
        %v2043 = vadd.f32 %v503, %v2039
        %v2044 = vld [vmem:[%s450 + $0x2] sm:$0x1]
        %v2045 = vld [vmem:[%s450 + $0x3] sm:$0x1]
        %v2046 = vsel %vm554, %v2042, 0.0
        %2047 = vadd.xlane.f32.xlu0 %v2046
        %v2048 = vpop.xlane.xlu0 %2047
        %v2049 = vsel %vm554, %v2043, 0.0
        %2050 = vadd.xlane.f32.xlu0 %v2049
        %v2051 = vpop.xlane.xlu0 %2050
        %v2052 = vrcp.pop 32.0
        %v2053 = vmul.f32 %v2048, %v2052
        %v2054 = vmul.f32 %v2051, %v2052
        %v2055 = vsub.f32 %v2042, %v2053
        %v2056 = vsub.f32 %v2043, %v2054
        %v2057 = vmul.f32 %v2055, %v2055
        %v2058 = vmul.f32 %v2056, %v2056
        %v2059 = vsel %vm554, %v2057, 0.0
        %2060 = vadd.xlane.f32.xlu0 %v2059
        %v2061 = vpop.xlane.xlu0 %2060
        %v2062 = vsel %vm554, %v2058, 0.0
        %2063 = vadd.xlane.f32.xlu0 %v2062
        %v2064 = vpop.xlane.xlu0 %2063
        %v2065 = vmul.f32 %v2061, %v2052
        %v2066 = vmul.f32 %v2064, %v2052
        %v2067 = vadd.f32 %v2065, 1e-12
        %v2068 = vadd.f32 %v2066, 1e-12
        %v2069 = vrsqrt.pop %v2067
        %v2070 = vrsqrt.pop %v2068
        %v2071 = vmul.f32 %v2055, %v2069
        %v2072 = vmul.f32 %v2056, %v2070
        %v2073 = vlaneseq
        %v2074 = vshrl.u32 %v2073, 7
        %v2075 = vsub.s32 0, %v2074
        %v2076 = vrot.slane %v2044, %v2075
        %v2077 = vmul.f32 %v2071, %v2076
        %v2078 = vmul.f32 %v2072, %v2076
        %v2079 = vlaneseq
        %v2080 = vshrl.u32 %v2079, 7
        %v2081 = vsub.s32 0, %v2080
        %v2082 = vrot.slane %v2045, %v2081
        %v2083 = vadd.f32 %v2077, %v2082
        %v2084 = vadd.f32 %v2078, %v2082
        %v2085 = vpack.c.bf16 %v2084, %v2083
        %v2086 = vld [vmem:[%s438] sm:$0xf]
        %v2087 = vld [vmem:[%s438 + $0x4] sm:$0xf]
        %v2088 = vld [vmem:[%s438 + $0x8] sm:$0xf]
        %v2089 = vld [vmem:[%s438 + $0xc] sm:$0xf]
        %v2090 = vld [vmem:[%s441] sm:$0x1]
        %v2092 = vlaneseq
        %v2093 = vshrl.u32 %v2092, 7
        %v2094 = vsub.s32 0, %v2093
        %v2095 = vrot.slane %v2090, %v2094
        %v2101 = vunpack.c.l.b16 %v2086
        %v2102 = vunpack.c.l.b16 %v2087
        %v2103 = vunpack.c.l.b16 %v2088
        %v2104 = vunpack.c.l.b16 %v2089
        %v2105 = vpack.c.b16 %v2102, %v2101
        %v2106 = vpack.c.b16 %v2104, %v2103
        %v2110 = vsel %vm554, %v2085, 0
        %2112 = vmatprep.subr.bf16.mxu0 0
        %2113 = vmatpush1.bf16.msra.mxu0 %v2105
        %2114 = vmatprep.subr.bf16.mxu0 0
        %2115 = vmatpush1.bf16.msra.mxu0 %v2106
        %2116 = vmatprep.subr.bf16.mxu0 0
        %2117 = vmatpush1.bf16.msra.mxu0 0
        %2118 = vmatprep.subr.bf16.mxu0 0
        %2119 = vmatpush1.bf16.msra.mxu0 0
        %2120 = vmatprep.subr.bf16.mxu0 0
        %2121 = vmatpush1.bf16.msra.mxu0 0
        %2122 = vmatprep.subr.bf16.mxu0 0
        %2123 = vmatpush1.bf16.msra.mxu0 0
        %2124 = vmatprep.subr.bf16.mxu0 0
        %2125 = vmatpush1.bf16.msra.mxu0 0
        %2126 = vmatprep.subr.bf16.mxu0 0
        %2127 = vmatpush1.bf16.msra.mxu0 0
        %2128 = vmatprep.subr.bf16.mxu0 0
        %2129 = vmatpush1.bf16.msra.mxu0 0
        %2130 = vmatprep.subr.bf16.mxu0 0
        %2131 = vmatpush1.bf16.msra.mxu0 0
        %2132 = vmatprep.subr.bf16.mxu0 0
        %2133 = vmatpush1.bf16.msra.mxu0 0
        %2134 = vmatprep.subr.bf16.mxu0 0
        %2135 = vmatpush1.bf16.msra.mxu0 0
        %2136 = vmatprep.subr.bf16.mxu0 0
        %2137 = vmatpush1.bf16.msra.mxu0 0
        %2138 = vmatprep.subr.bf16.mxu0 0
        %2139 = vmatpush1.bf16.msra.mxu0 0
        %2140 = vmatprep.subr.bf16.mxu0 0
        %2141 = vmatpush1.bf16.msra.mxu0 0
        %2142 = vmatprep.subr.bf16.mxu0 0
        %2143 = vmatpush1.bf16.msra.mxu0 0
        %2144 = vmatprep.mubr.bf16.mxu0 0
        %2145 = vmatmul.mubr.bf16.gmra.mrb[0].mxu0 %v2110
        %v2146 = vpop.f32.mrb[0].mxu0
        %v2147 = vadd.f32 %v2095, %v2146
        %v2148 = vpop.f32.mrb[0].mxu0
        %v2149 = vpop.f32.mrb[0].mxu0
        %v2150 = vadd.f32 %v2095, %v2149
        %v2151 = vpop.f32.mrb[0].mxu0
        %2152 = vdwg.mxu0
        %v2153 = vmul.f32 %v2147, %v2147
        %v2154 = vmul.f32 %v2150, %v2150
        %v2155 = vmul.f32 %v2147, %v2153
        %v2156 = vmul.f32 %v2150, %v2154
        %v2157 = vmul.f32 %v2155, 0.044715
        %v2158 = vmul.f32 %v2156, 0.044715
        %v2159 = vadd.f32 %v2147, %v2157
        %v2160 = vadd.f32 %v2150, %v2158
        %v2161 = vmul.f32 %v2159, 0.7978846
        %v2162 = vmul.f32 %v2160, 0.7978846
        %v2163 = vtanh.pop %v2161
        %v2164 = vtanh.pop %v2162
        %v2165 = vadd.f32 %v2163, 1.0
        %v2166 = vadd.f32 %v2164, 1.0
        %v2167 = vmul.f32 %v2165, 0.5
        %v2168 = vmul.f32 %v2166, 0.5
        %v2169 = vmul.f32 %v2147, %v2167
        %v2170 = vmul.f32 %v2150, %v2168
        %v2171 = vpack.c.bf16 %v2170, %v2169
        %v2172 = vld [vmem:[%s446] sm:$0xf]
        %v2173 = vld [vmem:[%s446 + $0x4] sm:$0xf]
        %v2174 = vld [vmem:[%s446 + $0x8] sm:$0xf]
        %v2175 = vld [vmem:[%s446 + $0xc] sm:$0xf]
        %v2176 = vld [vmem:[%s446 + $0x10] sm:$0xf]
        %v2177 = vld [vmem:[%s446 + $0x14] sm:$0xf]
        %v2178 = vld [vmem:[%s446 + $0x18] sm:$0xf]
        %v2179 = vld [vmem:[%s446 + $0x1c] sm:$0xf]
        %v2180 = vld [vmem:[%s446 + $0x20] sm:$0xf]
        %v2181 = vld [vmem:[%s446 + $0x24] sm:$0xf]
        %v2182 = vld [vmem:[%s446 + $0x28] sm:$0xf]
        %v2183 = vld [vmem:[%s446 + $0x2c] sm:$0xf]
        %v2184 = vld [vmem:[%s446 + $0x30] sm:$0xf]
        %v2185 = vld [vmem:[%s446 + $0x34] sm:$0xf]
        %v2186 = vld [vmem:[%s446 + $0x38] sm:$0xf]
        %v2187 = vld [vmem:[%s446 + $0x3c] sm:$0xf]
        %v2188 = vld [vmem:[%s450 + $0x1] sm:$0x1]
        %v2189 = vlaneseq
        %v2190 = vshrl.u32 %v2189, 7
        %v2191 = vsub.s32 0, %v2190
        %v2192 = vrot.slane %v2188, %v2191
        %v2209 = vunpack.c.l.b16 %v2172
        %v2210 = vunpack.c.l.b16 %v2173
        %v2211 = vunpack.c.l.b16 %v2174
        %v2212 = vunpack.c.l.b16 %v2175
        %v2213 = vunpack.c.l.b16 %v2176
        %v2214 = vunpack.c.l.b16 %v2177
        %v2215 = vunpack.c.l.b16 %v2178
        %v2216 = vunpack.c.l.b16 %v2179
        %v2217 = vunpack.c.l.b16 %v2180
        %v2218 = vunpack.c.l.b16 %v2181
        %v2219 = vunpack.c.l.b16 %v2182
        %v2220 = vunpack.c.l.b16 %v2183
        %v2221 = vunpack.c.l.b16 %v2184
        %v2222 = vunpack.c.l.b16 %v2185
        %v2223 = vunpack.c.l.b16 %v2186
        %v2224 = vunpack.c.l.b16 %v2187
        %v2225 = vpack.c.b16 %v2210, %v2209
        %v2226 = vpack.c.b16 %v2212, %v2211
        %v2227 = vpack.c.b16 %v2214, %v2213
        %v2228 = vpack.c.b16 %v2216, %v2215
        %v2229 = vpack.c.b16 %v2218, %v2217
        %v2230 = vpack.c.b16 %v2220, %v2219
        %v2231 = vpack.c.b16 %v2222, %v2221
        %v2232 = vpack.c.b16 %v2224, %v2223
        %2241 = vmatprep.subr.bf16.mxu0 0
        %2242 = vmatpush1.bf16.msra.mxu0 %v2225
        %2243 = vmatprep.subr.bf16.mxu0 0
        %2244 = vmatpush1.bf16.msra.mxu0 %v2226
        %2245 = vmatprep.subr.bf16.mxu0 0
        %2246 = vmatpush1.bf16.msra.mxu0 %v2227
        %2247 = vmatprep.subr.bf16.mxu0 0
        %2248 = vmatpush1.bf16.msra.mxu0 %v2228
        %2249 = vmatprep.subr.bf16.mxu0 0
        %2250 = vmatpush1.bf16.msra.mxu0 %v2229
        %2251 = vmatprep.subr.bf16.mxu0 0
        %2252 = vmatpush1.bf16.msra.mxu0 %v2230
        %2253 = vmatprep.subr.bf16.mxu0 0
        %2254 = vmatpush1.bf16.msra.mxu0 %v2231
        %2255 = vmatprep.subr.bf16.mxu0 0
        %2256 = vmatpush1.bf16.msra.mxu0 %v2232
        %2257 = vmatprep.subr.bf16.mxu0 0
        %2258 = vmatpush1.bf16.msra.mxu0 0
        %2259 = vmatprep.subr.bf16.mxu0 0
        %2260 = vmatpush1.bf16.msra.mxu0 0
        %2261 = vmatprep.subr.bf16.mxu0 0
        %2262 = vmatpush1.bf16.msra.mxu0 0
        %2263 = vmatprep.subr.bf16.mxu0 0
        %2264 = vmatpush1.bf16.msra.mxu0 0
        %2265 = vmatprep.subr.bf16.mxu0 0
        %2266 = vmatpush1.bf16.msra.mxu0 0
        %2267 = vmatprep.subr.bf16.mxu0 0
        %2268 = vmatpush1.bf16.msra.mxu0 0
        %2269 = vmatprep.subr.bf16.mxu0 0
        %2270 = vmatpush1.bf16.msra.mxu0 0
        %2271 = vmatprep.subr.bf16.mxu0 0
        %2272 = vmatpush1.bf16.msra.mxu0 0
        %2273 = vmatprep.mubr.bf16.mxu0 0
        %2274 = vmatmul.mubr.bf16.gmra.mrb[0].mxu0 %v2171
        %v2275 = vpop.f32.mrb[0].mxu0
        %v2276 = vadd.f32 %v2192, %v2275
        %v2277 = vpop.f32.mrb[0].mxu0
        %v2278 = vpop.f32.mrb[0].mxu0
        %v2279 = vadd.f32 %v2192, %v2278
        %v2280 = vpop.f32.mrb[0].mxu0
        %2281 = vdwg.mxu0
        %v2282 = vadd.f32 %v2083, %v2276
        %v2283 = vadd.f32 %v2084, %v2279
        %v2284 = vld [vmem:[%s450 + $0x4] sm:$0x1]
        %v2285 = vld [vmem:[%s450 + $0x5] sm:$0x1]
        %v2286 = vsel %vm554, %v2282, 0.0
        %2287 = vadd.xlane.f32.xlu0 %v2286
        %v2288 = vpop.xlane.xlu0 %2287
        %v2289 = vsel %vm554, %v2283, 0.0
        %2290 = vadd.xlane.f32.xlu0 %v2289
        %v2291 = vpop.xlane.xlu0 %2290
        %v2292 = vmul.f32 %v2288, %v2052
        %v2293 = vmul.f32 %v2291, %v2052
        %v2294 = vsub.f32 %v2282, %v2292
        %v2295 = vsub.f32 %v2283, %v2293
        %v2296 = vmul.f32 %v2294, %v2294
        %v2297 = vmul.f32 %v2295, %v2295
        %v2298 = vsel %vm554, %v2296, 0.0
        %2299 = vadd.xlane.f32.xlu0 %v2298
        %v2300 = vpop.xlane.xlu0 %2299
        %v2301 = vsel %vm554, %v2297, 0.0
        %2302 = vadd.xlane.f32.xlu0 %v2301
        %v2303 = vpop.xlane.xlu0 %2302
        %v2304 = vmul.f32 %v2300, %v2052
        %v2305 = vmul.f32 %v2303, %v2052
        %v2306 = vadd.f32 %v2304, 1e-12
        %v2307 = vadd.f32 %v2305, 1e-12
        %v2308 = vrsqrt.pop %v2306
        %v2309 = vrsqrt.pop %v2307
        %v2310 = vmul.f32 %v2294, %v2308
        %v2311 = vmul.f32 %v2295, %v2309
        %v2312 = vlaneseq
        %v2313 = vshrl.u32 %v2312, 7
        %v2314 = vsub.s32 0, %v2313
        %v2315 = vrot.slane %v2284, %v2314
        %v2316 = vmul.f32 %v2310, %v2315
        %v2317 = vmul.f32 %v2311, %v2315
        %v2318 = vlaneseq
        %v2319 = vshrl.u32 %v2318, 7
        %v2320 = vsub.s32 0, %v2319
        %v2321 = vrot.slane %v2285, %v2320
        %v2322 = vadd.f32 %v2316, %v2321
        %v2323 = vadd.f32 %v2317, %v2321
        %2324 = vst.msk [vmem:[#allocation2] sm:$0xff] %vm554, %v2322
        %2325 = vst.msk [vmem:[#allocation2 + $0x8] sm:$0xff] %vm554, %v2323
        %2326 = vst.msk [vmem:[#allocation3] sm:$0xff] %vm554, %v2322
        %2327 = vst.msk [vmem:[#allocation3 + $0x8] sm:$0xff] %vm554, %v2323
        // Predicated region
        $region65: #{tpu_custom_call.1} parent=59 // pred_check
          %p2328 = pneg %p280
        $region66: #{tpu_custom_call.1} parent=59 // pred_check_branch
          %2330 = sbr.rel (%p2328) target = $region68
        $region67: #{tpu_custom_call.1} parent=59 // pred_region
          %s2332 = ssub.s32 256, 256
          %2333 = vsyncadd [#allocation4], %s2332
          %s2334 = sshll.u32 [#allocation3], 4
          %s2335 = int_to_ptr.vmem [resolvable:$true] %s2334
          %2340 = dma.vmem_to_hbm [thread:$0]  %s2335, 256, %s10, [#allocation4], 128, 128, 8
        $region68: #{tpu_custom_call.1} parent=59 // pred_fallthru
          _
        // Predicated region
        $region69: #{tpu_custom_call.1} parent=59 // pred_check
          %p2341 = pneg %p280
        $region70: #{tpu_custom_call.1} parent=59 // pred_check_branch
          %2343 = sbr.rel (%p2341) target = $region72
        $region71: #{tpu_custom_call.1} parent=59 // pred_region
          %2344 = dma.done [#allocation4], 256
        $region72: #{tpu_custom_call.1} parent=59 // pred_fallthru
          _
      $region60: #{tpu_custom_call.1} parent=5 // pred_fallthru
        _
      %p2345 = scmp.le.s32.totalorder 2, %s17
      // Predicated region
      $region73: #{tpu_custom_call.1} parent=5 // pred_check
        %p2346 = pneg %p2345
      $region74: #{tpu_custom_call.1} parent=5 // pred_check_branch
        %2348 = sbr.rel (%p2346) target = $region76
      $region75: #{tpu_custom_call.1} parent=5 // pred_region
        %s2349 = ssub.s32 %s17, 2
      $region76: #{tpu_custom_call.1} parent=5 // pred_fallthru
        _
    $region6: #{tpu_custom_call.1} parent=1 // loop_footer
      %s21 = sadd.s32 1, %s17
    $region7: #{tpu_custom_call.1} parent=1 // loop_footer_branch
      %16 = sbr.rel target = $region3
    $region8: #{tpu_custom_call.1} parent=1 // loop_exit
      _
    %2350 = vsyncpa [#allocation4], 1
    %s2351 = scalar_lea.sflag [#allocation4], 1
    %2352 = vsyncpa %s2351, 1

</llo_original>
